<compile_context>
chip_gen: v5e
topology: v5e:2x2
jax: 0.10.0
libtpu: 0.0.40
codegen_flags: <defaults>
</compile_context>

<pallas_src>
import functools
import math

import jax
import jax.numpy as jnp
from jax import lax
from jax.experimental import pallas as pl
from jax.experimental.pallas import tpu as pltpu

PAD_ID = 0
LN_EPS = 1e-6


# ------------------------ feature probe: Buffered(1) ------------------------

def _probe_single_buffering():
    """Return {'pipeline_mode': pl.Buffered(1)} if supported on this backend."""
    try:
        kw = {"pipeline_mode": pl.Buffered(1)}

        def k(x_ref, o_ref):
            o_ref[...] = x_ref[...] + 1.0

        f = pl.pallas_call(
            k,
            out_shape=jax.ShapeDtypeStruct((8, 128), jnp.float32),
            grid=(1,),
            in_specs=[pl.BlockSpec((8, 128), lambda i: (0, 0), **kw)],
            out_specs=pl.BlockSpec((8, 128), lambda i: (0, 0)),
        )
        jax.block_until_ready(f(jnp.zeros((8, 128), jnp.float32)))
        return kw
    except Exception:
        return {}


_CONST_SPEC_KW = _probe_single_buffering()


def _ff_row_chunk(S, F, budget_bytes=4 << 20):
    """Largest multiple-of-8 divisor of S whose (chunk, F) f32 tile fits budget."""
    cands = [c for c in range(8, S + 1, 8) if S % c == 0]
    if not cands:
        return S
    fit = [c for c in cands if c * F * 4 <= budget_bytes]
    return max(fit) if fit else min(cands)


# ----------------------------- Pallas kernels ------------------------------

def _act_step_kernel(x_ref, pemb_ref, ga_ref, gb_ref, wqkv_ref, bqkv_ref,
                     wo_ref, bo_ref, gf_ref, bf_ref, w1_ref, b1_ref,
                     w2_ref, b2_ref, sw_ref, sb_ref,
                     sumw_ref, acc_ref, done_ref,
                     y_ref, acc_o_ref, sumw_o_ref, done_o_ref,
                     ctx_scr, *, num_head, eps, ff_chunk):
    """Fused single ACT step for one batch element:
       (x+pemb) -> pre-LN -> QKV -> MHA -> out proj -> residual
       -> pre-LN -> FF1(relu) -> FF2 -> residual -> halter -> ACT accumulate."""
    S, D = x_ref.shape
    A = ctx_scr.shape[1]
    H = num_head
    dh = A // H
    scale = 1.0 / math.sqrt(dh)
    bf16 = jnp.bfloat16

    # ---------------- attention sub-layer ----------------
    xp = x_ref[...] + pemb_ref[...]                        # (S, D) f32
    mu = jnp.mean(xp, axis=-1, keepdims=True)
    xc = xp - mu
    var = jnp.mean(xc * xc, axis=-1, keepdims=True)
    ln = xc * lax.rsqrt(var + eps) * ga_ref[...] + gb_ref[...]

    # weights already bf16 in HBM/VMEM; only the activation is cast
    qkv = jnp.dot(ln.astype(wqkv_ref.dtype), wqkv_ref[...],
                  preferred_element_type=jnp.float32) + bqkv_ref[...]   # (S, 3A)

    for h in range(H):                                     # static unroll over heads
        qh = qkv[:, h * dh:(h + 1) * dh]
        kh = qkv[:, A + h * dh:A + (h + 1) * dh]
        vh = qkv[:, 2 * A + h * dh:2 * A + (h + 1) * dh]
        s = lax.dot_general(qh.astype(bf16), kh.astype(bf16),
                            (((1,), (1,)), ((), ())),
                            preferred_element_type=jnp.float32) * scale  # (S, S)
        s = s - jnp.max(s, axis=-1, keepdims=True)
        p = jnp.exp(s)
        p = p * pl.reciprocal(jnp.sum(p, axis=-1, keepdims=True), approx=True)
        # write each head directly into VMEM scratch (no lane-dim concatenate)
        ctx_scr[:, h * dh:(h + 1) * dh] = jnp.dot(
            p.astype(bf16), vh.astype(bf16), preferred_element_type=jnp.float32)

    ctx = jnp.dot(ctx_scr[...].astype(wo_ref.dtype), wo_ref[...],
                  preferred_element_type=jnp.float32) + bo_ref[...] + xp  # residual

    # --------- FF + halter + ACT bookkeeping (row-chunked) ---------
    n_chunks = S // ff_chunk
    for ci in range(n_chunks):
        r0 = ci * ff_chunk
        r1 = r0 + ff_chunk
        c = ctx[r0:r1, :]
        mu = jnp.mean(c, axis=-1, keepdims=True)
        cc = c - mu
        var = jnp.mean(cc * cc, axis=-1, keepdims=True)
        lnf = cc * lax.rsqrt(var + eps) * gf_ref[...] + bf_ref[...]

        h1 = jnp.dot(lnf.astype(w1_ref.dtype), w1_ref[...],
                     preferred_element_type=jnp.float32) + b1_ref[...]
        h1 = jnp.maximum(h1, 0.0)
        y = jnp.dot(h1.astype(w2_ref.dtype), w2_ref[...],
                    preferred_element_type=jnp.float32) + b2_ref[...] + c  # residual

        # Halter: Scorer + Sigmoid as a lane reduction (no N=1 MXU matmul).
        s_h = jax.nn.sigmoid(jnp.sum(y * sw_ref[...], axis=-1, keepdims=True)
                             + sb_ref[...])                               # (chunk, 1)

        sum_w = sumw_ref[r0:r1, :]
        w = jnp.minimum(1.0 - sum_w, s_h)                 # min(max_w, w)
        sum_w_new = sum_w + w
        done_new = jnp.maximum(done_ref[r0:r1, :],
                               ((1.0 - sum_w_new) < 0.01).astype(jnp.float32))

        y_ref[r0:r1, :] = y
        acc_o_ref[r0:r1, :] = acc_ref[r0:r1, :] + w * y   # running weighted sum
        sumw_o_ref[r0:r1, :] = sum_w_new
        done_o_ref[r0:r1, :] = done_new


def _combine_norm_kernel(acc_ref, y_ref, sumw_ref, g_ref, b_ref, o_ref, *, eps):
    """acc + remainv * last_out (== wl[-1] += remainv), then output LayerNorm."""
    x = acc_ref[...] + (1.0 - sumw_ref[...]) * y_ref[...]
    mu = jnp.mean(x, axis=-1, keepdims=True)
    xc = x - mu
    var = jnp.mean(xc * xc, axis=-1, keepdims=True)
    o_ref[...] = (xc * lax.rsqrt(var + eps) * g_ref[...] + b_ref[...]).astype(o_ref.dtype)


# ------------------------------ kernel wrappers -----------------------------

def act_encoder_step(params, x, pemb, sum_w, acc, done, num_head):
    """One fused ACT step. x/acc: (B,S,D); sum_w/done: (B,S,1); pemb: (S,D)."""
    B, S, D = x.shape
    A3 = params["wqkv"].shape[1]
    A = A3 // 3
    F = params["w1"].shape[1]
    ff_chunk = _ff_row_chunk(S, F)

    kern = functools.partial(_act_step_kernel, num_head=num_head, eps=LN_EPS,
                             ff_chunk=ff_chunk)
    batch3 = lambda b: (b, 0, 0)
    const2 = lambda b: (0, 0)

    def cspec(shape):  # constant-index block: single-buffered when supported
        return pl.BlockSpec(shape, const2, **_CONST_SPEC_KW)

    # Rough VMEM footprint: resident bf16 weights + biases + activation slabs.
    weight_bytes = 2 * (D * A3 + A * D + D * F + F * D)
    act_bytes = 4 * (4 * S * D + S * A3 + S * A + S * S + ff_chunk * F)
    vmem_limit = int(min(max(2 * (weight_bytes + act_bytes), 32 << 20), 64 << 20))

    return pl.pallas_call(
        kern,
        out_shape=(jax.ShapeDtypeStruct((B, S, D), jnp.float32),   # y (new out)
                   jax.ShapeDtypeStruct((B, S, D), jnp.float32),   # acc
                   jax.ShapeDtypeStruct((B, S, 1), jnp.float32),   # sum_w
                   jax.ShapeDtypeStruct((B, S, 1), jnp.float32)),  # done
        grid=(B,),
        in_specs=[
            pl.BlockSpec((None, S, D), batch3),   # 0  x
            cspec((S, D)),                        # 1  pemb (per-step coord emb)
            cspec((1, D)), cspec((1, D)),         # 2,3  ln_attn gamma/beta
            cspec((D, A3)), cspec((1, A3)),       # 4,5  wqkv (bf16), bqkv
            cspec((A, D)), cspec((1, D)),         # 6,7  wo   (bf16), bo
            cspec((1, D)), cspec((1, D)),         # 8,9  ln_ff gamma/beta
            cspec((D, F)), cspec((1, F)),         # 10,11 w1  (bf16), b1
            cspec((F, D)), cspec((1, D)),         # 12,13 w2  (bf16), b2
            cspec((1, D)), cspec((1, 1)),         # 14,15 scorer w/b
            pl.BlockSpec((None, S, 1), batch3),   # 16 sum_w
            pl.BlockSpec((None, S, D), batch3),   # 17 acc
            pl.BlockSpec((None, S, 1), batch3),   # 18 done
        ],
        out_specs=(pl.BlockSpec((None, S, D), batch3),
                   pl.BlockSpec((None, S, D), batch3),
                   pl.BlockSpec((None, S, 1), batch3),
                   pl.BlockSpec((None, S, 1), batch3)),
        scratch_shapes=[pltpu.VMEM((S, A), jnp.float32)],
        input_output_aliases={17: 1, 16: 2, 18: 3},   # acc/sum_w/done in place
        compiler_params=pltpu.CompilerParams(
            dimension_semantics=("parallel",),
            vmem_limit_bytes=vmem_limit),
    )(x, pemb,
      params["ln_attn_g"].reshape(1, D), params["ln_attn_b"].reshape(1, D),
      params["wqkv"], params["bqkv"].reshape(1, A3),
      params["wo"], params["bo"].reshape(1, D),
      params["ln_ff_g"].reshape(1, D), params["ln_ff_b"].reshape(1, D),
      params["w1"], params["b1"].reshape(1, F),
      params["w2"], params["b2"].reshape(1, D),
      params["scorer_w"].reshape(1, D), params["scorer_b"].reshape(1, 1),
      sum_w, acc, done)


def final_combine_norm(acc, y_last, sum_w, gamma, beta):
    B, S, D = acc.shape
    kern = functools.partial(_combine_norm_kernel, eps=LN_EPS)
    batch3 = lambda b: (b, 0, 0)
    const2 = lambda b: (0, 0)
    return pl.pallas_call(
        kern,
        out_shape=jax.ShapeDtypeStruct((B, S, D), jnp.float32),
        grid=(B,),
        in_specs=[pl.BlockSpec((None, S, D), batch3),
                  pl.BlockSpec((None, S, D), batch3),
                  pl.BlockSpec((None, S, 1), batch3),
                  pl.BlockSpec((1, D), const2, **_CONST_SPEC_KW),
                  pl.BlockSpec((1, D), const2, **_CONST_SPEC_KW)],
        out_specs=pl.BlockSpec((None, S, D), batch3),
        compiler_params=pltpu.CompilerParams(dimension_semantics=("parallel",)),
    )(acc, y_last, sum_w, gamma.reshape(1, D), beta.reshape(1, D))


# ------------------------------ model pieces -------------------------------

def coordinate_emb(num_steps, num_pos, isize):
    """CoordinateEmb table: sinusoidal positional + step embedding, (steps, pos, isize)."""
    pos = jnp.arange(num_pos, dtype=jnp.float32)[None, :, None]
    step = jnp.arange(num_steps, dtype=jnp.float32)[:, None, None]
    div = jnp.exp(jnp.arange(0, isize, 2, dtype=jnp.float32)
                  * (-math.log(10000.0) / isize))
    sin_part = jnp.sin(pos * div) + jnp.sin(step * div)
    cos_part = jnp.cos(pos * div) + jnp.cos(step * div)
    pe = jnp.stack([sin_part, cos_part], axis=-1).reshape(num_steps, num_pos, isize)
    return pe.astype(jnp.float32)


def init_params(key, nwd, isize, ahsize, fhsize):
    ks = jax.random.split(key, 12)

    def nrm(k, shape, scale=0.02):
        return (scale * jax.random.normal(k, shape)).astype(jnp.float32)

    p = {}
    wemb = nrm(ks[0], (nwd, isize))
    p["wemb"] = wemb.at[PAD_ID].set(0.0)          # padding_idx=pad_id
    # self-attention — Q/K/V concatenated for a single fused MXU matmul.
    # MXU weights stored in bf16 in HBM (f32 accumulation in-kernel).
    wq = nrm(ks[1], (isize, ahsize))
    wk = nrm(ks[2], (isize, ahsize))
    wv = nrm(ks[3], (isize, ahsize))
    p["wqkv"] = jnp.concatenate([wq, wk, wv], axis=1).astype(jnp.bfloat16)
    p["bqkv"] = jnp.zeros((3 * ahsize,), jnp.float32)
    p["wo"] = nrm(ks[4], (ahsize, isize)).astype(jnp.bfloat16)
    p["bo"] = jnp.zeros((isize,), jnp.float32)
    p["ln_attn_g"] = jnp.ones((isize,), jnp.float32)
    p["ln_attn_b"] = jnp.zeros((isize,), jnp.float32)
    # feed-forward
    p["w1"] = nrm(ks[5], (isize, fhsize)).astype(jnp.bfloat16)
    p["b1"] = jnp.zeros((fhsize,), jnp.float32)
    p["w2"] = nrm(ks[6], (fhsize, isize)).astype(jnp.bfloat16)
    p["b2"] = jnp.zeros((isize,), jnp.float32)
    p["ln_ff_g"] = jnp.ones((isize,), jnp.float32)
    p["ln_ff_b"] = jnp.zeros((isize,), jnp.float32)
    # halter: Scorer(isize) + Sigmoid
    p["scorer_w"] = nrm(ks[7], (isize, 1))
    p["scorer_b"] = jnp.zeros((1,), jnp.float32)
    # output LayerNorm
    p["out_ln_g"] = jnp.ones((isize,), jnp.float32)
    p["out_ln_b"] = jnp.zeros((isize,), jnp.float32)
    return p


@functools.partial(jax.jit, static_argnames=("num_layer", "num_head"))
def encoder_forward(params, inputs, pemb_table, num_layer, num_head):
    """inputs: (B,S) int32 token ids -> (B,S,D) float32. Eval-mode forward."""
    B, S = inputs.shape
    D = params["wemb"].shape[1]

    out0 = params["wemb"][inputs]                 # embedding gather (XLA glue)
    pemb = pemb_table[:, :S, :]                   # (num_layer, S, D)
    # dropout == 0.0 -> no-op

    acc0 = jnp.zeros((B, S, D), jnp.float32)      # running sum_i w_i * out_i
    sumw0 = jnp.zeros((B, S, 1), jnp.float32)
    done0 = jnp.zeros((B, S, 1), jnp.float32)
    step0 = jnp.int32(0)

    def cond(carry):
        step, _out, _acc, _sumw, done = carry
        return jnp.logical_and(step < num_layer,
                               jnp.logical_not(jnp.all(done > 0.5)))

    def body(carry):
        step, out, acc, sumw, done = carry
        pe = lax.dynamic_index_in_dim(pemb, step, axis=0, keepdims=False)  # (S,D)
        y, acc, sumw, done = act_encoder_step(params, out, pe, sumw, acc, done,
                                              num_head)
        return (step + 1, y, acc, sumw, done)

    # Device-side ACT early exit (no per-step host sync).
    _step, out, acc, sumw, _done = lax.while_loop(
        cond, body, (step0, out0, acc0, sumw0, done0))

    # wl[-1] += remainv, weighted combine and out_normer — fused in one kernel.
    return final_combine_norm(acc, out, sumw,
                              params["out_ln_g"], params["out_ln_b"])
    # TODO(synk): optional attention `mask` argument not supported (mask=None only).
    # TODO(synk): training-mode ACT_Loss accumulation not implemented (eval only).


# ---------------------------------- main -----------------------------------

if __name__ == "__main__":
    B, S = 2, 8
    NWD, ISIZE, NLAYER, NHEAD = 64, 32, 3, 4
    XSEQL = 16
    AHSIZE = ISIZE
    FHSIZE = AHSIZE * 4

    key = jax.random.PRNGKey(0)
    pkey, ikey = jax.random.split(key)

    params = init_params(pkey, NWD, ISIZE, AHSIZE, FHSIZE)
    pemb_table = coordinate_emb(NLAYER, XSEQL, ISIZE)

    inputs = jax.random.randint(ikey, (B, S), 1, NWD, dtype=jnp.int32)
    inputs = inputs.at[:, -1].set(PAD_ID)   # a little padding, like real batches

    out = encoder_forward(params, inputs, pemb_table,
                          num_layer=NLAYER, num_head=NHEAD)
    jax.block_until_ready(out)
    assert out.shape == (B, S, ISIZE) and out.dtype == jnp.float32
    assert bool(jnp.all(jnp.isfinite(out)))
    print("KERNEL_OK")
</pallas_src>

<mosaic_0001>
module attributes {stable_mosaic.version = 11 : i64} {
  func.func @k(%arg0: i32, %arg1: memref<8x128xf32, #tpu.memory_space<vmem>>, %arg2: memref<8x128xf32, #tpu.memory_space<vmem>>) attributes {dimension_semantics = [#tpu.dimension_semantics<arbitrary>], iteration_bounds = array<i64: 1>, scalar_prefetch = 0 : i64, scratch_operands = 0 : i64, tpu.core_type = #tpu.core_type<tc>, window_params = [{pipeline_mode = #tpu.pipeline_mode<synchronous>, transform_indices = @transform_0, window_bounds = array<i64: 8, 128>}, {pipeline_mode = #tpu.pipeline_mode<synchronous>, transform_indices = @transform_1, window_bounds = array<i64: 8, 128>}]} {
    %c0 = arith.constant 0 : index
    %c0_0 = arith.constant 0 : index
    %0 = vector.load %arg1[%c0, %c0_0] : memref<8x128xf32, #tpu.memory_space<vmem>>, vector<8x128xf32>
    %cst = arith.constant 1.000000e+00 : f32
    %1 = vector.broadcast %cst : f32 to vector<8x128xf32>
    %2 = arith.addf %0, %1 : vector<8x128xf32>
    %c0_1 = arith.constant 0 : index
    %c0_2 = arith.constant 0 : index
    %3 = vector.load %arg2[%c0_1, %c0_2] : memref<8x128xf32, #tpu.memory_space<vmem>>, vector<8x128xf32>
    tpu.vector_store %arg2[%c0_1, %c0_2], %2 {strides = array<i32>} : memref<8x128xf32, #tpu.memory_space<vmem>>, vector<8x128xf32>,
    return
  }
  func.func @transform_0(%arg0: i32) -> (i32, i32) {
    %c0_i32 = arith.constant 0 : i32
    %c0_i32_0 = arith.constant 0 : i32
    %c0_i32_1 = arith.constant 0 : i32
    return %c0_i32, %c0_i32_0 : i32, i32
  }
  func.func @transform_1(%arg0: i32) -> (i32, i32) {
    %c0_i32 = arith.constant 0 : i32
    %c0_i32_0 = arith.constant 0 : i32
    %c0_i32_1 = arith.constant 0 : i32
    return %c0_i32, %c0_i32_0 : i32, i32
  }
}

module attributes {stable_mosaic.version = 11 : i64} {
  func.func @_combine_norm_kernel(%arg0: i32, %arg1: memref<1x8x32xf32, #tpu.memory_space<vmem>>, %arg2: memref<1x8x32xf32, #tpu.memory_space<vmem>>, %arg3: memref<1x8x1xf32, #tpu.memory_space<vmem>>, %arg4: memref<1x32xf32, #tpu.memory_space<vmem>>, %arg5: memref<1x32xf32, #tpu.memory_space<vmem>>, %arg6: memref<1x8x32xf32, #tpu.memory_space<vmem>>) attributes {dimension_semantics = [#tpu.dimension_semantics<parallel>], iteration_bounds = array<i64: 2>, scalar_prefetch = 0 : i64, scratch_operands = 0 : i64, tpu.core_type = #tpu.core_type<tc>, window_params = [{transform_indices = @transform_0, window_bounds = array<i64: 1, 8, 32>}, {transform_indices = @transform_1, window_bounds = array<i64: 1, 8, 32>}, {transform_indices = @transform_2, window_bounds = array<i64: 1, 8, 1>}, {pipeline_mode = #tpu.pipeline_mode<synchronous>, transform_indices = @transform_3, window_bounds = array<i64: 1, 32>}, {pipeline_mode = #tpu.pipeline_mode<synchronous>, transform_indices = @transform_4, window_bounds = array<i64: 1, 32>}, {transform_indices = @transform_5, window_bounds = array<i64: 1, 8, 32>}]} {
    %c0 = arith.constant 0 : index
    %c0_0 = arith.constant 0 : index
    %c0_1 = arith.constant 0 : index
    %0 = vector.load %arg1[%c0, %c0_0, %c0_1] : memref<1x8x32xf32, #tpu.memory_space<vmem>>, vector<1x8x32xf32>
    %1 = vector.shape_cast %0 : vector<1x8x32xf32> to vector<8x32xf32>
    %c0_2 = arith.constant 0 : index
    %c0_3 = arith.constant 0 : index
    %c0_4 = arith.constant 0 : index
    %2 = vector.load %arg3[%c0_2, %c0_3, %c0_4] : memref<1x8x1xf32, #tpu.memory_space<vmem>>, vector<1x8x1xf32>
    %3 = vector.shape_cast %2 : vector<1x8x1xf32> to vector<8x1xf32>
    %cst = arith.constant 1.000000e+00 : f32
    %4 = vector.broadcast %cst : f32 to vector<8x1xf32>
    %5 = arith.subf %4, %3 : vector<8x1xf32>
    %c0_5 = arith.constant 0 : index
    %c0_6 = arith.constant 0 : index
    %c0_7 = arith.constant 0 : index
    %6 = vector.load %arg2[%c0_5, %c0_6, %c0_7] : memref<1x8x32xf32, #tpu.memory_space<vmem>>, vector<1x8x32xf32>
    %7 = vector.shape_cast %6 : vector<1x8x32xf32> to vector<8x32xf32>
    %8 = vector.broadcast %5 : vector<8x1xf32> to vector<8x32xf32>
    %9 = arith.mulf %8, %7 : vector<8x32xf32>
    %10 = arith.addf %1, %9 : vector<8x32xf32>
    %cst_8 = arith.constant dense<0.000000e+00> : vector<8xf32>
    %11 = vector.multi_reduction <add>, %10, %cst_8 [1] : vector<8x32xf32> to vector<8xf32>
    %12 = vector.shape_cast %11 : vector<8xf32> to vector<8x1xf32>
    %cst_9 = arith.constant 3.200000e+01 : f32
    %13 = vector.broadcast %cst_9 : f32 to vector<8x1xf32>
    %14 = arith.divf %12, %13 : vector<8x1xf32>
    %15 = vector.broadcast %14 : vector<8x1xf32> to vector<8x32xf32>
    %16 = arith.subf %10, %15 : vector<8x32xf32>
    %17 = arith.mulf %16, %16 : vector<8x32xf32>
    %cst_10 = arith.constant dense<0.000000e+00> : vector<8xf32>
    %18 = vector.multi_reduction <add>, %17, %cst_10 [1] : vector<8x32xf32> to vector<8xf32>
    %19 = vector.shape_cast %18 : vector<8xf32> to vector<8x1xf32>
    %cst_11 = arith.constant 3.200000e+01 : f32
    %20 = vector.broadcast %cst_11 : f32 to vector<8x1xf32>
    %21 = arith.divf %19, %20 : vector<8x1xf32>
    %cst_12 = arith.constant 9.99999997E-7 : f32
    %22 = vector.broadcast %cst_12 : f32 to vector<8x1xf32>
    %23 = arith.addf %21, %22 : vector<8x1xf32>
    %24 = math.rsqrt %23 : vector<8x1xf32>
    %25 = vector.broadcast %24 : vector<8x1xf32> to vector<8x32xf32>
    %26 = arith.mulf %16, %25 : vector<8x32xf32>
    %c0_13 = arith.constant 0 : index
    %c0_14 = arith.constant 0 : index
    %27 = vector.load %arg4[%c0_13, %c0_14] : memref<1x32xf32, #tpu.memory_space<vmem>>, vector<1x32xf32>
    %28 = vector.broadcast %27 : vector<1x32xf32> to vector<8x32xf32>
    %29 = arith.mulf %26, %28 : vector<8x32xf32>
    %c0_15 = arith.constant 0 : index
    %c0_16 = arith.constant 0 : index
    %30 = vector.load %arg5[%c0_15, %c0_16] : memref<1x32xf32, #tpu.memory_space<vmem>>, vector<1x32xf32>
    %31 = vector.broadcast %30 : vector<1x32xf32> to vector<8x32xf32>
    %32 = arith.addf %29, %31 : vector<8x32xf32>
    %c0_17 = arith.constant 0 : index
    %c0_18 = arith.constant 0 : index
    %c0_19 = arith.constant 0 : index
    %33 = vector.load %arg6[%c0_17, %c0_18, %c0_19] : memref<1x8x32xf32, #tpu.memory_space<vmem>>, vector<1x8x32xf32>
    %34 = vector.shape_cast %33 : vector<1x8x32xf32> to vector<8x32xf32>
    %35 = vector.shape_cast %32 : vector<8x32xf32> to vector<1x8x32xf32>
    tpu.vector_store %arg6[%c0_17, %c0_18, %c0_19], %35 {strides = array<i32>} : memref<1x8x32xf32, #tpu.memory_space<vmem>>, vector<1x8x32xf32>,
    return
  }
  func.func @transform_0(%arg0: i32) -> (i32, i32, i32) {
    %c0_i32 = arith.constant 0 : i32
    %c0_i32_0 = arith.constant 0 : i32
    %c0_i32_1 = arith.constant 0 : i32
    return %arg0, %c0_i32, %c0_i32_0 : i32, i32, i32
  }
  func.func @transform_1(%arg0: i32) -> (i32, i32, i32) {
    %c0_i32 = arith.constant 0 : i32
    %c0_i32_0 = arith.constant 0 : i32
    %c0_i32_1 = arith.constant 0 : i32
    return %arg0, %c0_i32, %c0_i32_0 : i32, i32, i32
  }
  func.func @transform_2(%arg0: i32) -> (i32, i32, i32) {
    %c0_i32 = arith.constant 0 : i32
    %c0_i32_0 = arith.constant 0 : i32
    %c0_i32_1 = arith.constant 0 : i32
    return %arg0, %c0_i32, %c0_i32_0 : i32, i32, i32
  }
  func.func @transform_3(%arg0: i32) -> (i32, i32) {
    %c0_i32 = arith.constant 0 : i32
    %c0_i32_0 = arith.constant 0 : i32
    %c0_i32_1 = arith.constant 0 : i32
    return %c0_i32, %c0_i32_0 : i32, i32
  }
  func.func @transform_4(%arg0: i32) -> (i32, i32) {
    %c0_i32 = arith.constant 0 : i32
    %c0_i32_0 = arith.constant 0 : i32
    %c0_i32_1 = arith.constant 0 : i32
    return %c0_i32, %c0_i32_0 : i32, i32
  }
  func.func @transform_5(%arg0: i32) -> (i32, i32, i32) {
    %c0_i32 = arith.constant 0 : i32
    %c0_i32_0 = arith.constant 0 : i32
    %c0_i32_1 = arith.constant 0 : i32
    return %arg0, %c0_i32, %c0_i32_0 : i32, i32, i32
  }
}

module attributes {stable_mosaic.version = 11 : i64} {
  func.func @_act_step_kernel(%arg0: i32, %arg1: memref<1x8x32xf32, #tpu.memory_space<vmem>>, %arg2: memref<8x32xf32, #tpu.memory_space<vmem>>, %arg3: memref<1x32xf32, #tpu.memory_space<vmem>>, %arg4: memref<1x32xf32, #tpu.memory_space<vmem>>, %arg5: memref<32x96xbf16, #tpu.memory_space<vmem>>, %arg6: memref<1x96xf32, #tpu.memory_space<vmem>>, %arg7: memref<32x32xbf16, #tpu.memory_space<vmem>>, %arg8: memref<1x32xf32, #tpu.memory_space<vmem>>, %arg9: memref<1x32xf32, #tpu.memory_space<vmem>>, %arg10: memref<1x32xf32, #tpu.memory_space<vmem>>, %arg11: memref<32x128xbf16, #tpu.memory_space<vmem>>, %arg12: memref<1x128xf32, #tpu.memory_space<vmem>>, %arg13: memref<128x32xbf16, #tpu.memory_space<vmem>>, %arg14: memref<1x32xf32, #tpu.memory_space<vmem>>, %arg15: memref<1x32xf32, #tpu.memory_space<vmem>>, %arg16: memref<1x1xf32, #tpu.memory_space<vmem>>, %arg17: memref<1x8x1xf32, #tpu.memory_space<vmem>>, %arg18: memref<1x8x32xf32, #tpu.memory_space<vmem>>, %arg19: memref<1x8x1xf32, #tpu.memory_space<vmem>>, %arg20: memref<1x8x32xf32, #tpu.memory_space<vmem>>, %arg21: memref<1x8x32xf32, #tpu.memory_space<vmem>>, %arg22: memref<1x8x1xf32, #tpu.memory_space<vmem>>, %arg23: memref<1x8x1xf32, #tpu.memory_space<vmem>>, %arg24: memref<8x32xf32, #tpu.memory_space<vmem>>) attributes {dimension_semantics = [#tpu.dimension_semantics<parallel>], iteration_bounds = array<i64: 2>, scalar_prefetch = 0 : i64, scratch_operands = 1 : i64, tpu.core_type = #tpu.core_type<tc>, window_params = [{transform_indices = @transform_0, window_bounds = array<i64: 1, 8, 32>}, {pipeline_mode = #tpu.pipeline_mode<synchronous>, transform_indices = @transform_1, window_bounds = array<i64: 8, 32>}, {pipeline_mode = #tpu.pipeline_mode<synchronous>, transform_indices = @transform_2, window_bounds = array<i64: 1, 32>}, {pipeline_mode = #tpu.pipeline_mode<synchronous>, transform_indices = @transform_3, window_bounds = array<i64: 1, 32>}, {pipeline_mode = #tpu.pipeline_mode<synchronous>, transform_indices = @transform_4, window_bounds = array<i64: 32, 96>}, {pipeline_mode = #tpu.pipeline_mode<synchronous>, transform_indices = @transform_5, window_bounds = array<i64: 1, 96>}, {pipeline_mode = #tpu.pipeline_mode<synchronous>, transform_indices = @transform_6, window_bounds = array<i64: 32, 32>}, {pipeline_mode = #tpu.pipeline_mode<synchronous>, transform_indices = @transform_7, window_bounds = array<i64: 1, 32>}, {pipeline_mode = #tpu.pipeline_mode<synchronous>, transform_indices = @transform_8, window_bounds = array<i64: 1, 32>}, {pipeline_mode = #tpu.pipeline_mode<synchronous>, transform_indices = @transform_9, window_bounds = array<i64: 1, 32>}, {pipeline_mode = #tpu.pipeline_mode<synchronous>, transform_indices = @transform_10, window_bounds = array<i64: 32, 128>}, {pipeline_mode = #tpu.pipeline_mode<synchronous>, transform_indices = @transform_11, window_bounds = array<i64: 1, 128>}, {pipeline_mode = #tpu.pipeline_mode<synchronous>, transform_indices = @transform_12, window_bounds = array<i64: 128, 32>}, {pipeline_mode = #tpu.pipeline_mode<synchronous>, transform_indices = @transform_13, window_bounds = array<i64: 1, 32>}, {pipeline_mode = #tpu.pipeline_mode<synchronous>, transform_indices = @transform_14, window_bounds = array<i64: 1, 32>}, {pipeline_mode = #tpu.pipeline_mode<synchronous>, transform_indices = @transform_15, window_bounds = array<i64: 1, 1>}, {transform_indices = @transform_16, window_bounds = array<i64: 1, 8, 1>}, {transform_indices = @transform_17, window_bounds = array<i64: 1, 8, 32>}, {transform_indices = @transform_18, window_bounds = array<i64: 1, 8, 1>}, {transform_indices = @transform_19, window_bounds = array<i64: 1, 8, 32>}, {transform_indices = @transform_20, window_bounds = array<i64: 1, 8, 32>}, {transform_indices = @transform_21, window_bounds = array<i64: 1, 8, 1>}, {transform_indices = @transform_22, window_bounds = array<i64: 1, 8, 1>}]} {
    %c0 = arith.constant 0 : index
    %c0_0 = arith.constant 0 : index
    %c0_1 = arith.constant 0 : index
    %0 = vector.load %arg1[%c0, %c0_0, %c0_1] : memref<1x8x32xf32, #tpu.memory_space<vmem>>, vector<1x8x32xf32>
    %1 = vector.shape_cast %0 : vector<1x8x32xf32> to vector<8x32xf32>
    %c0_2 = arith.constant 0 : index
    %c0_3 = arith.constant 0 : index
    %2 = vector.load %arg2[%c0_2, %c0_3] : memref<8x32xf32, #tpu.memory_space<vmem>>, vector<8x32xf32>
    %3 = arith.addf %1, %2 : vector<8x32xf32>
    %cst = arith.constant dense<0.000000e+00> : vector<8xf32>
    %4 = vector.multi_reduction <add>, %3, %cst [1] : vector<8x32xf32> to vector<8xf32>
    %5 = vector.shape_cast %4 : vector<8xf32> to vector<8x1xf32>
    %cst_4 = arith.constant 3.200000e+01 : f32
    %6 = vector.broadcast %cst_4 : f32 to vector<8x1xf32>
    %7 = arith.divf %5, %6 : vector<8x1xf32>
    %8 = vector.broadcast %7 : vector<8x1xf32> to vector<8x32xf32>
    %9 = arith.subf %3, %8 : vector<8x32xf32>
    %10 = arith.mulf %9, %9 : vector<8x32xf32>
    %cst_5 = arith.constant dense<0.000000e+00> : vector<8xf32>
    %11 = vector.multi_reduction <add>, %10, %cst_5 [1] : vector<8x32xf32> to vector<8xf32>
    %12 = vector.shape_cast %11 : vector<8xf32> to vector<8x1xf32>
    %cst_6 = arith.constant 3.200000e+01 : f32
    %13 = vector.broadcast %cst_6 : f32 to vector<8x1xf32>
    %14 = arith.divf %12, %13 : vector<8x1xf32>
    %cst_7 = arith.constant 9.99999997E-7 : f32
    %15 = vector.broadcast %cst_7 : f32 to vector<8x1xf32>
    %16 = arith.addf %14, %15 : vector<8x1xf32>
    %17 = math.rsqrt %16 : vector<8x1xf32>
    %18 = vector.broadcast %17 : vector<8x1xf32> to vector<8x32xf32>
    %19 = arith.mulf %9, %18 : vector<8x32xf32>
    %c0_8 = arith.constant 0 : index
    %c0_9 = arith.constant 0 : index
    %20 = vector.load %arg3[%c0_8, %c0_9] : memref<1x32xf32, #tpu.memory_space<vmem>>, vector<1x32xf32>
    %21 = vector.broadcast %20 : vector<1x32xf32> to vector<8x32xf32>
    %22 = arith.mulf %19, %21 : vector<8x32xf32>
    %c0_10 = arith.constant 0 : index
    %c0_11 = arith.constant 0 : index
    %23 = vector.load %arg4[%c0_10, %c0_11] : memref<1x32xf32, #tpu.memory_space<vmem>>, vector<1x32xf32>
    %24 = vector.broadcast %23 : vector<1x32xf32> to vector<8x32xf32>
    %25 = arith.addf %22, %24 : vector<8x32xf32>
    %26 = arith.truncf %25 : vector<8x32xf32> to vector<8x32xbf16>
    %c0_12 = arith.constant 0 : index
    %c0_13 = arith.constant 0 : index
    %27 = vector.load %arg5[%c0_12, %c0_13] : memref<32x96xbf16, #tpu.memory_space<vmem>>, vector<32x96xbf16>
    %cst_14 = arith.constant dense<0.000000e+00> : vector<8x96xf32>
    %28 = tpu.matmul %26, %27, %cst_14 {dimension_numbers = #tpu.dot_dimension_numbers<[1], [0], [0], [1], [0, 0, 1, 1], [], []>} : vector<8x32xbf16>, vector<32x96xbf16>, vector<8x96xf32> -> vector<8x96xf32>
    %c0_15 = arith.constant 0 : index
    %c0_16 = arith.constant 0 : index
    %29 = vector.load %arg6[%c0_15, %c0_16] : memref<1x96xf32, #tpu.memory_space<vmem>>, vector<1x96xf32>
    %30 = vector.broadcast %29 : vector<1x96xf32> to vector<8x96xf32>
    %31 = arith.addf %28, %30 : vector<8x96xf32>
    %32 = vector.extract_strided_slice %31 {offsets = [0, 0], sizes = [8, 8], strides = [1, 1]} : vector<8x96xf32> to vector<8x8xf32>
    %33 = vector.extract_strided_slice %31 {offsets = [0, 32], sizes = [8, 8], strides = [1, 1]} : vector<8x96xf32> to vector<8x8xf32>
    %34 = vector.extract_strided_slice %31 {offsets = [0, 64], sizes = [8, 8], strides = [1, 1]} : vector<8x96xf32> to vector<8x8xf32>
    %35 = arith.truncf %32 : vector<8x8xf32> to vector<8x8xbf16>
    %36 = arith.truncf %33 : vector<8x8xf32> to vector<8x8xbf16>
    %cst_17 = arith.constant dense<0.000000e+00> : vector<8x8xf32>
    %37 = tpu.matmul %35, %36, %cst_17 {dimension_numbers = #tpu.dot_dimension_numbers<[1], [1], [0], [0], [0, 0, 1, 0], [], []>} : vector<8x8xbf16>, vector<8x8xbf16>, vector<8x8xf32> -> vector<8x8xf32>
    %cst_18 = arith.constant 0.353553385 : f32
    %38 = vector.broadcast %cst_18 : f32 to vector<8x8xf32>
    %39 = arith.mulf %37, %38 : vector<8x8xf32>
    %cst_19 = arith.constant dense<0xFF800000> : vector<8xf32>
    %40 = vector.multi_reduction <maximumf>, %39, %cst_19 [1] : vector<8x8xf32> to vector<8xf32>
    %41 = vector.shape_cast %40 : vector<8xf32> to vector<8x1xf32>
    %42 = vector.broadcast %41 : vector<8x1xf32> to vector<8x8xf32>
    %43 = arith.subf %39, %42 : vector<8x8xf32>
    %44 = math.exp %43 : vector<8x8xf32>
    %cst_20 = arith.constant dense<0.000000e+00> : vector<8xf32>
    %45 = vector.multi_reduction <add>, %44, %cst_20 [1] : vector<8x8xf32> to vector<8xf32>
    %46 = vector.shape_cast %45 : vector<8xf32> to vector<8x1xf32>
    %47 = tpu.reciprocal %46 {approx = true} : vector<8x1xf32> -> vector<8x1xf32>
    %48 = vector.broadcast %47 : vector<8x1xf32> to vector<8x8xf32>
    %49 = arith.mulf %44, %48 : vector<8x8xf32>
    %50 = arith.truncf %49 : vector<8x8xf32> to vector<8x8xbf16>
    %51 = arith.truncf %34 : vector<8x8xf32> to vector<8x8xbf16>
    %cst_21 = arith.constant dense<0.000000e+00> : vector<8x8xf32>
    %52 = tpu.matmul %50, %51, %cst_21 {dimension_numbers = #tpu.dot_dimension_numbers<[1], [0], [0], [1], [0, 0, 1, 1], [], []>} : vector<8x8xbf16>, vector<8x8xbf16>, vector<8x8xf32> -> vector<8x8xf32>
    %c0_22 = arith.constant 0 : index
    %c0_23 = arith.constant 0 : index
    %53 = vector.load %arg24[%c0_22, %c0_23] : memref<8x32xf32, #tpu.memory_space<vmem>>, vector<8x8xf32>
    tpu.vector_store %arg24[%c0_22, %c0_23], %52 {strides = array<i32>} : memref<8x32xf32, #tpu.memory_space<vmem>>, vector<8x8xf32>,
    %54 = vector.extract_strided_slice %31 {offsets = [0, 8], sizes = [8, 8], strides = [1, 1]} : vector<8x96xf32> to vector<8x8xf32>
    %55 = vector.extract_strided_slice %31 {offsets = [0, 40], sizes = [8, 8], strides = [1, 1]} : vector<8x96xf32> to vector<8x8xf32>
    %56 = vector.extract_strided_slice %31 {offsets = [0, 72], sizes = [8, 8], strides = [1, 1]} : vector<8x96xf32> to vector<8x8xf32>
    %57 = arith.truncf %54 : vector<8x8xf32> to vector<8x8xbf16>
    %58 = arith.truncf %55 : vector<8x8xf32> to vector<8x8xbf16>
    %cst_24 = arith.constant dense<0.000000e+00> : vector<8x8xf32>
    %59 = tpu.matmul %57, %58, %cst_24 {dimension_numbers = #tpu.dot_dimension_numbers<[1], [1], [0], [0], [0, 0, 1, 0], [], []>} : vector<8x8xbf16>, vector<8x8xbf16>, vector<8x8xf32> -> vector<8x8xf32>
    %cst_25 = arith.constant 0.353553385 : f32
    %60 = vector.broadcast %cst_25 : f32 to vector<8x8xf32>
    %61 = arith.mulf %59, %60 : vector<8x8xf32>
    %cst_26 = arith.constant dense<0xFF800000> : vector<8xf32>
    %62 = vector.multi_reduction <maximumf>, %61, %cst_26 [1] : vector<8x8xf32> to vector<8xf32>
    %63 = vector.shape_cast %62 : vector<8xf32> to vector<8x1xf32>
    %64 = vector.broadcast %63 : vector<8x1xf32> to vector<8x8xf32>
    %65 = arith.subf %61, %64 : vector<8x8xf32>
    %66 = math.exp %65 : vector<8x8xf32>
    %cst_27 = arith.constant dense<0.000000e+00> : vector<8xf32>
    %67 = vector.multi_reduction <add>, %66, %cst_27 [1] : vector<8x8xf32> to vector<8xf32>
    %68 = vector.shape_cast %67 : vector<8xf32> to vector<8x1xf32>
    %69 = tpu.reciprocal %68 {approx = true} : vector<8x1xf32> -> vector<8x1xf32>
    %70 = vector.broadcast %69 : vector<8x1xf32> to vector<8x8xf32>
    %71 = arith.mulf %66, %70 : vector<8x8xf32>
    %72 = arith.truncf %71 : vector<8x8xf32> to vector<8x8xbf16>
    %73 = arith.truncf %56 : vector<8x8xf32> to vector<8x8xbf16>
    %cst_28 = arith.constant dense<0.000000e+00> : vector<8x8xf32>
    %74 = tpu.matmul %72, %73, %cst_28 {dimension_numbers = #tpu.dot_dimension_numbers<[1], [0], [0], [1], [0, 0, 1, 1], [], []>} : vector<8x8xbf16>, vector<8x8xbf16>, vector<8x8xf32> -> vector<8x8xf32>
    %c0_29 = arith.constant 0 : index
    %c8 = arith.constant 8 : index
    %75 = vector.load %arg24[%c0_29, %c8] : memref<8x32xf32, #tpu.memory_space<vmem>>, vector<8x8xf32>
    tpu.vector_store %arg24[%c0_29, %c8], %74 {strides = array<i32>} : memref<8x32xf32, #tpu.memory_space<vmem>>, vector<8x8xf32>,
    %76 = vector.extract_strided_slice %31 {offsets = [0, 16], sizes = [8, 8], strides = [1, 1]} : vector<8x96xf32> to vector<8x8xf32>
    %77 = vector.extract_strided_slice %31 {offsets = [0, 48], sizes = [8, 8], strides = [1, 1]} : vector<8x96xf32> to vector<8x8xf32>
    %78 = vector.extract_strided_slice %31 {offsets = [0, 80], sizes = [8, 8], strides = [1, 1]} : vector<8x96xf32> to vector<8x8xf32>
    %79 = arith.truncf %76 : vector<8x8xf32> to vector<8x8xbf16>
    %80 = arith.truncf %77 : vector<8x8xf32> to vector<8x8xbf16>
    %cst_30 = arith.constant dense<0.000000e+00> : vector<8x8xf32>
    %81 = tpu.matmul %79, %80, %cst_30 {dimension_numbers = #tpu.dot_dimension_numbers<[1], [1], [0], [0], [0, 0, 1, 0], [], []>} : vector<8x8xbf16>, vector<8x8xbf16>, vector<8x8xf32> -> vector<8x8xf32>
    %cst_31 = arith.constant 0.353553385 : f32
    %82 = vector.broadcast %cst_31 : f32 to vector<8x8xf32>
    %83 = arith.mulf %81, %82 : vector<8x8xf32>
    %cst_32 = arith.constant dense<0xFF800000> : vector<8xf32>
    %84 = vector.multi_reduction <maximumf>, %83, %cst_32 [1] : vector<8x8xf32> to vector<8xf32>
    %85 = vector.shape_cast %84 : vector<8xf32> to vector<8x1xf32>
    %86 = vector.broadcast %85 : vector<8x1xf32> to vector<8x8xf32>
    %87 = arith.subf %83, %86 : vector<8x8xf32>
    %88 = math.exp %87 : vector<8x8xf32>
    %cst_33 = arith.constant dense<0.000000e+00> : vector<8xf32>
    %89 = vector.multi_reduction <add>, %88, %cst_33 [1] : vector<8x8xf32> to vector<8xf32>
    %90 = vector.shape_cast %89 : vector<8xf32> to vector<8x1xf32>
    %91 = tpu.reciprocal %90 {approx = true} : vector<8x1xf32> -> vector<8x1xf32>
    %92 = vector.broadcast %91 : vector<8x1xf32> to vector<8x8xf32>
    %93 = arith.mulf %88, %92 : vector<8x8xf32>
    %94 = arith.truncf %93 : vector<8x8xf32> to vector<8x8xbf16>
    %95 = arith.truncf %78 : vector<8x8xf32> to vector<8x8xbf16>
    %cst_34 = arith.constant dense<0.000000e+00> : vector<8x8xf32>
    %96 = tpu.matmul %94, %95, %cst_34 {dimension_numbers = #tpu.dot_dimension_numbers<[1], [0], [0], [1], [0, 0, 1, 1], [], []>} : vector<8x8xbf16>, vector<8x8xbf16>, vector<8x8xf32> -> vector<8x8xf32>
    %c0_35 = arith.constant 0 : index
    %c16 = arith.constant 16 : index
    %97 = vector.load %arg24[%c0_35, %c16] : memref<8x32xf32, #tpu.memory_space<vmem>>, vector<8x8xf32>
    tpu.vector_store %arg24[%c0_35, %c16], %96 {strides = array<i32>} : memref<8x32xf32, #tpu.memory_space<vmem>>, vector<8x8xf32>,
    %98 = vector.extract_strided_slice %31 {offsets = [0, 24], sizes = [8, 8], strides = [1, 1]} : vector<8x96xf32> to vector<8x8xf32>
    %99 = vector.extract_strided_slice %31 {offsets = [0, 56], sizes = [8, 8], strides = [1, 1]} : vector<8x96xf32> to vector<8x8xf32>
    %100 = vector.extract_strided_slice %31 {offsets = [0, 88], sizes = [8, 8], strides = [1, 1]} : vector<8x96xf32> to vector<8x8xf32>
    %101 = arith.truncf %98 : vector<8x8xf32> to vector<8x8xbf16>
    %102 = arith.truncf %99 : vector<8x8xf32> to vector<8x8xbf16>
    %cst_36 = arith.constant dense<0.000000e+00> : vector<8x8xf32>
    %103 = tpu.matmul %101, %102, %cst_36 {dimension_numbers = #tpu.dot_dimension_numbers<[1], [1], [0], [0], [0, 0, 1, 0], [], []>} : vector<8x8xbf16>, vector<8x8xbf16>, vector<8x8xf32> -> vector<8x8xf32>
    %cst_37 = arith.constant 0.353553385 : f32
    %104 = vector.broadcast %cst_37 : f32 to vector<8x8xf32>
    %105 = arith.mulf %103, %104 : vector<8x8xf32>
    %cst_38 = arith.constant dense<0xFF800000> : vector<8xf32>
    %106 = vector.multi_reduction <maximumf>, %105, %cst_38 [1] : vector<8x8xf32> to vector<8xf32>
    %107 = vector.shape_cast %106 : vector<8xf32> to vector<8x1xf32>
    %108 = vector.broadcast %107 : vector<8x1xf32> to vector<8x8xf32>
    %109 = arith.subf %105, %108 : vector<8x8xf32>
    %110 = math.exp %109 : vector<8x8xf32>
    %cst_39 = arith.constant dense<0.000000e+00> : vector<8xf32>
    %111 = vector.multi_reduction <add>, %110, %cst_39 [1] : vector<8x8xf32> to vector<8xf32>
    %112 = vector.shape_cast %111 : vector<8xf32> to vector<8x1xf32>
    %113 = tpu.reciprocal %112 {approx = true} : vector<8x1xf32> -> vector<8x1xf32>
    %114 = vector.broadcast %113 : vector<8x1xf32> to vector<8x8xf32>
    %115 = arith.mulf %110, %114 : vector<8x8xf32>
    %116 = arith.truncf %115 : vector<8x8xf32> to vector<8x8xbf16>
    %117 = arith.truncf %100 : vector<8x8xf32> to vector<8x8xbf16>
    %cst_40 = arith.constant dense<0.000000e+00> : vector<8x8xf32>
    %118 = tpu.matmul %116, %117, %cst_40 {dimension_numbers = #tpu.dot_dimension_numbers<[1], [0], [0], [1], [0, 0, 1, 1], [], []>} : vector<8x8xbf16>, vector<8x8xbf16>, vector<8x8xf32> -> vector<8x8xf32>
    %c0_41 = arith.constant 0 : index
    %c24 = arith.constant 24 : index
    %119 = vector.load %arg24[%c0_41, %c24] : memref<8x32xf32, #tpu.memory_space<vmem>>, vector<8x8xf32>
    tpu.vector_store %arg24[%c0_41, %c24], %118 {strides = array<i32>} : memref<8x32xf32, #tpu.memory_space<vmem>>, vector<8x8xf32>,
    %c0_42 = arith.constant 0 : index
    %c0_43 = arith.constant 0 : index
    %120 = vector.load %arg24[%c0_42, %c0_43] : memref<8x32xf32, #tpu.memory_space<vmem>>, vector<8x32xf32>
    %121 = arith.truncf %120 : vector<8x32xf32> to vector<8x32xbf16>
    %c0_44 = arith.constant 0 : index
    %c0_45 = arith.constant 0 : index
    %122 = vector.load %arg7[%c0_44, %c0_45] : memref<32x32xbf16, #tpu.memory_space<vmem>>, vector<32x32xbf16>
    %cst_46 = arith.constant dense<0.000000e+00> : vector<8x32xf32>
    %123 = tpu.matmul %121, %122, %cst_46 {dimension_numbers = #tpu.dot_dimension_numbers<[1], [0], [0], [1], [0, 0, 1, 1], [], []>} : vector<8x32xbf16>, vector<32x32xbf16>, vector<8x32xf32> -> vector<8x32xf32>
    %c0_47 = arith.constant 0 : index
    %c0_48 = arith.constant 0 : index
    %124 = vector.load %arg8[%c0_47, %c0_48] : memref<1x32xf32, #tpu.memory_space<vmem>>, vector<1x32xf32>
    %125 = vector.broadcast %124 : vector<1x32xf32> to vector<8x32xf32>
    %126 = arith.addf %123, %125 : vector<8x32xf32>
    %127 = arith.addf %126, %3 : vector<8x32xf32>
    %cst_49 = arith.constant dense<0.000000e+00> : vector<8xf32>
    %128 = vector.multi_reduction <add>, %127, %cst_49 [1] : vector<8x32xf32> to vector<8xf32>
    %129 = vector.shape_cast %128 : vector<8xf32> to vector<8x1xf32>
    %cst_50 = arith.constant 3.200000e+01 : f32
    %130 = vector.broadcast %cst_50 : f32 to vector<8x1xf32>
    %131 = arith.divf %129, %130 : vector<8x1xf32>
    %132 = vector.broadcast %131 : vector<8x1xf32> to vector<8x32xf32>
    %133 = arith.subf %127, %132 : vector<8x32xf32>
    %134 = arith.mulf %133, %133 : vector<8x32xf32>
    %cst_51 = arith.constant dense<0.000000e+00> : vector<8xf32>
    %135 = vector.multi_reduction <add>, %134, %cst_51 [1] : vector<8x32xf32> to vector<8xf32>
    %136 = vector.shape_cast %135 : vector<8xf32> to vector<8x1xf32>
    %cst_52 = arith.constant 3.200000e+01 : f32
    %137 = vector.broadcast %cst_52 : f32 to vector<8x1xf32>
    %138 = arith.divf %136, %137 : vector<8x1xf32>
    %cst_53 = arith.constant 9.99999997E-7 : f32
    %139 = vector.broadcast %cst_53 : f32 to vector<8x1xf32>
    %140 = arith.addf %138, %139 : vector<8x1xf32>
    %141 = math.rsqrt %140 : vector<8x1xf32>
    %142 = vector.broadcast %141 : vector<8x1xf32> to vector<8x32xf32>
    %143 = arith.mulf %133, %142 : vector<8x32xf32>
    %c0_54 = arith.constant 0 : index
    %c0_55 = arith.constant 0 : index
    %144 = vector.load %arg9[%c0_54, %c0_55] : memref<1x32xf32, #tpu.memory_space<vmem>>, vector<1x32xf32>
    %145 = vector.broadcast %144 : vector<1x32xf32> to vector<8x32xf32>
    %146 = arith.mulf %143, %145 : vector<8x32xf32>
    %c0_56 = arith.constant 0 : index
    %c0_57 = arith.constant 0 : index
    %147 = vector.load %arg10[%c0_56, %c0_57] : memref<1x32xf32, #tpu.memory_space<vmem>>, vector<1x32xf32>
    %148 = vector.broadcast %147 : vector<1x32xf32> to vector<8x32xf32>
    %149 = arith.addf %146, %148 : vector<8x32xf32>
    %150 = arith.truncf %149 : vector<8x32xf32> to vector<8x32xbf16>
    %c0_58 = arith.constant 0 : index
    %c0_59 = arith.constant 0 : index
    %151 = vector.load %arg11[%c0_58, %c0_59] : memref<32x128xbf16, #tpu.memory_space<vmem>>, vector<32x128xbf16>
    %cst_60 = arith.constant dense<0.000000e+00> : vector<8x128xf32>
    %152 = tpu.matmul %150, %151, %cst_60 {dimension_numbers = #tpu.dot_dimension_numbers<[1], [0], [0], [1], [0, 0, 1, 1], [], []>} : vector<8x32xbf16>, vector<32x128xbf16>, vector<8x128xf32> -> vector<8x128xf32>
    %c0_61 = arith.constant 0 : index
    %c0_62 = arith.constant 0 : index
    %153 = vector.load %arg12[%c0_61, %c0_62] : memref<1x128xf32, #tpu.memory_space<vmem>>, vector<1x128xf32>
    %154 = vector.broadcast %153 : vector<1x128xf32> to vector<8x128xf32>
    %155 = arith.addf %152, %154 : vector<8x128xf32>
    %cst_63 = arith.constant 0.000000e+00 : f32
    %156 = vector.broadcast %cst_63 : f32 to vector<8x128xf32>
    %157 = arith.maximumf %155, %156 : vector<8x128xf32>
    %158 = arith.truncf %157 : vector<8x128xf32> to vector<8x128xbf16>
    %c0_64 = arith.constant 0 : index
    %c0_65 = arith.constant 0 : index
    %159 = vector.load %arg13[%c0_64, %c0_65] : memref<128x32xbf16, #tpu.memory_space<vmem>>, vector<128x32xbf16>
    %cst_66 = arith.constant dense<0.000000e+00> : vector<8x32xf32>
    %160 = tpu.matmul %158, %159, %cst_66 {dimension_numbers = #tpu.dot_dimension_numbers<[1], [0], [0], [1], [0, 0, 1, 1], [], []>} : vector<8x128xbf16>, vector<128x32xbf16>, vector<8x32xf32> -> vector<8x32xf32>
    %c0_67 = arith.constant 0 : index
    %c0_68 = arith.constant 0 : index
    %161 = vector.load %arg14[%c0_67, %c0_68] : memref<1x32xf32, #tpu.memory_space<vmem>>, vector<1x32xf32>
    %162 = vector.broadcast %161 : vector<1x32xf32> to vector<8x32xf32>
    %163 = arith.addf %160, %162 : vector<8x32xf32>
    %164 = arith.addf %163, %127 : vector<8x32xf32>
    %c0_69 = arith.constant 0 : index
    %c0_70 = arith.constant 0 : index
    %165 = vector.load %arg15[%c0_69, %c0_70] : memref<1x32xf32, #tpu.memory_space<vmem>>, vector<1x32xf32>
    %166 = vector.broadcast %165 : vector<1x32xf32> to vector<8x32xf32>
    %167 = arith.mulf %164, %166 : vector<8x32xf32>
    %cst_71 = arith.constant dense<0.000000e+00> : vector<8xf32>
    %168 = vector.multi_reduction <add>, %167, %cst_71 [1] : vector<8x32xf32> to vector<8xf32>
    %169 = vector.shape_cast %168 : vector<8xf32> to vector<8x1xf32>
    %c0_72 = arith.constant 0 : index
    %c0_73 = arith.constant 0 : index
    %170 = vector.load %arg16[%c0_72, %c0_73] : memref<1x1xf32, #tpu.memory_space<vmem>>, vector<1x1xf32>
    %171 = vector.broadcast %170 : vector<1x1xf32> to vector<8x1xf32>
    %172 = arith.addf %169, %171 : vector<8x1xf32>
    %173 = arith.negf %172 : vector<8x1xf32>
    %174 = math.exp %173 : vector<8x1xf32>
    %cst_74 = arith.constant 1.000000e+00 : f32
    %175 = vector.broadcast %cst_74 : f32 to vector<8x1xf32>
    %176 = arith.addf %175, %174 : vector<8x1xf32>
    %177 = arith.divf %175, %176 : vector<8x1xf32>
    %c0_75 = arith.constant 0 : index
    %c0_76 = arith.constant 0 : index
    %c0_77 = arith.constant 0 : index
    %178 = vector.load %arg17[%c0_75, %c0_76, %c0_77] : memref<1x8x1xf32, #tpu.memory_space<vmem>>, vector<1x8x1xf32>
    %179 = vector.shape_cast %178 : vector<1x8x1xf32> to vector<8x1xf32>
    %cst_78 = arith.constant 1.000000e+00 : f32
    %180 = vector.broadcast %cst_78 : f32 to vector<8x1xf32>
    %181 = arith.subf %180, %179 : vector<8x1xf32>
    %182 = arith.minimumf %181, %177 : vector<8x1xf32>
    %183 = arith.addf %179, %182 : vector<8x1xf32>
    %c0_79 = arith.constant 0 : index
    %c0_80 = arith.constant 0 : index
    %c0_81 = arith.constant 0 : index
    %184 = vector.load %arg19[%c0_79, %c0_80, %c0_81] : memref<1x8x1xf32, #tpu.memory_space<vmem>>, vector<1x8x1xf32>
    %185 = vector.shape_cast %184 : vector<1x8x1xf32> to vector<8x1xf32>
    %cst_82 = arith.constant 1.000000e+00 : f32
    %186 = vector.broadcast %cst_82 : f32 to vector<8x1xf32>
    %187 = arith.subf %186, %183 : vector<8x1xf32>
    %cst_83 = arith.constant 0.00999999977 : f32
    %188 = vector.broadcast %cst_83 : f32 to vector<8x1xf32>
    %189 = arith.cmpf olt, %187, %188 : vector<8x1xf32>
    %190 = arith.extui %189 : vector<8x1xi1> to vector<8x1xi32>
    %191 = arith.sitofp %190 : vector<8x1xi32> to vector<8x1xf32>
    %192 = arith.maximumf %185, %191 : vector<8x1xf32>
    %c0_84 = arith.constant 0 : index
    %c0_85 = arith.constant 0 : index
    %c0_86 = arith.constant 0 : index
    %193 = vector.load %arg20[%c0_84, %c0_85, %c0_86] : memref<1x8x32xf32, #tpu.memory_space<vmem>>, vector<1x8x32xf32>
    %194 = vector.shape_cast %193 : vector<1x8x32xf32> to vector<8x32xf32>
    %195 = vector.shape_cast %164 : vector<8x32xf32> to vector<1x8x32xf32>
    tpu.vector_store %arg20[%c0_84, %c0_85, %c0_86], %195 {strides = array<i32>} : memref<1x8x32xf32, #tpu.memory_space<vmem>>, vector<1x8x32xf32>,
    %c0_87 = arith.constant 0 : index
    %c0_88 = arith.constant 0 : index
    %c0_89 = arith.constant 0 : index
    %196 = vector.load %arg18[%c0_87, %c0_88, %c0_89] : memref<1x8x32xf32, #tpu.memory_space<vmem>>, vector<1x8x32xf32>
    %197 = vector.shape_cast %196 : vector<1x8x32xf32> to vector<8x32xf32>
    %198 = vector.broadcast %182 : vector<8x1xf32> to vector<8x32xf32>
    %199 = arith.mulf %198, %164 : vector<8x32xf32>
    %200 = arith.addf %197, %199 : vector<8x32xf32>
    %c0_90 = arith.constant 0 : index
    %c0_91 = arith.constant 0 : index
    %c0_92 = arith.constant 0 : index
    %201 = vector.load %arg21[%c0_90, %c0_91, %c0_92] : memref<1x8x32xf32, #tpu.memory_space<vmem>>, vector<1x8x32xf32>
    %202 = vector.shape_cast %201 : vector<1x8x32xf32> to vector<8x32xf32>
    %203 = vector.shape_cast %200 : vector<8x32xf32> to vector<1x8x32xf32>
    tpu.vector_store %arg21[%c0_90, %c0_91, %c0_92], %203 {strides = array<i32>} : memref<1x8x32xf32, #tpu.memory_space<vmem>>, vector<1x8x32xf32>,
    %c0_93 = arith.constant 0 : index
    %c0_94 = arith.constant 0 : index
    %c0_95 = arith.constant 0 : index
    %204 = vector.load %arg22[%c0_93, %c0_94, %c0_95] : memref<1x8x1xf32, #tpu.memory_space<vmem>>, vector<1x8x1xf32>
    %205 = vector.shape_cast %204 : vector<1x8x1xf32> to vector<8x1xf32>
    %206 = vector.shape_cast %183 : vector<8x1xf32> to vector<1x8x1xf32>
    tpu.vector_store %arg22[%c0_93, %c0_94, %c0_95], %206 {strides = array<i32>} : memref<1x8x1xf32, #tpu.memory_space<vmem>>, vector<1x8x1xf32>,
    %c0_96 = arith.constant 0 : index
    %c0_97 = arith.constant 0 : index
    %c0_98 = arith.constant 0 : index
    %207 = vector.load %arg23[%c0_96, %c0_97, %c0_98] : memref<1x8x1xf32, #tpu.memory_space<vmem>>, vector<1x8x1xf32>
    %208 = vector.shape_cast %207 : vector<1x8x1xf32> to vector<8x1xf32>
    %209 = vector.shape_cast %192 : vector<8x1xf32> to vector<1x8x1xf32>
    tpu.vector_store %arg23[%c0_96, %c0_97, %c0_98], %209 {strides = array<i32>} : memref<1x8x1xf32, #tpu.memory_space<vmem>>, vector<1x8x1xf32>,
    return
  }
  func.func @transform_0(%arg0: i32) -> (i32, i32, i32) {
    %c0_i32 = arith.constant 0 : i32
    %c0_i32_0 = arith.constant 0 : i32
    %c0_i32_1 = arith.constant 0 : i32
    return %arg0, %c0_i32, %c0_i32_0 : i32, i32, i32
  }
  func.func @transform_1(%arg0: i32) -> (i32, i32) {
    %c0_i32 = arith.constant 0 : i32
    %c0_i32_0 = arith.constant 0 : i32
    %c0_i32_1 = arith.constant 0 : i32
    return %c0_i32, %c0_i32_0 : i32, i32
  }
  func.func @transform_2(%arg0: i32) -> (i32, i32) {
    %c0_i32 = arith.constant 0 : i32
    %c0_i32_0 = arith.constant 0 : i32
    %c0_i32_1 = arith.constant 0 : i32
    return %c0_i32, %c0_i32_0 : i32, i32
  }
  func.func @transform_3(%arg0: i32) -> (i32, i32) {
    %c0_i32 = arith.constant 0 : i32
    %c0_i32_0 = arith.constant 0 : i32
    %c0_i32_1 = arith.constant 0 : i32
    return %c0_i32, %c0_i32_0 : i32, i32
  }
  func.func @transform_4(%arg0: i32) -> (i32, i32) {
    %c0_i32 = arith.constant 0 : i32
    %c0_i32_0 = arith.constant 0 : i32
    %c0_i32_1 = arith.constant 0 : i32
    return %c0_i32, %c0_i32_0 : i32, i32
  }
  func.func @transform_5(%arg0: i32) -> (i32, i32) {
    %c0_i32 = arith.constant 0 : i32
    %c0_i32_0 = arith.constant 0 : i32
    %c0_i32_1 = arith.constant 0 : i32
    return %c0_i32, %c0_i32_0 : i32, i32
  }
  func.func @transform_6(%arg0: i32) -> (i32, i32) {
    %c0_i32 = arith.constant 0 : i32
    %c0_i32_0 = arith.constant 0 : i32
    %c0_i32_1 = arith.constant 0 : i32
    return %c0_i32, %c0_i32_0 : i32, i32
  }
  func.func @transform_7(%arg0: i32) -> (i32, i32) {
    %c0_i32 = arith.constant 0 : i32
    %c0_i32_0 = arith.constant 0 : i32
    %c0_i32_1 = arith.constant 0 : i32
    return %c0_i32, %c0_i32_0 : i32, i32
  }
  func.func @transform_8(%arg0: i32) -> (i32, i32) {
    %c0_i32 = arith.constant 0 : i32
    %c0_i32_0 = arith.constant 0 : i32
    %c0_i32_1 = arith.constant 0 : i32
    return %c0_i32, %c0_i32_0 : i32, i32
  }
  func.func @transform_9(%arg0: i32) -> (i32, i32) {
    %c0_i32 = arith.constant 0 : i32
    %c0_i32_0 = arith.constant 0 : i32
    %c0_i32_1 = arith.constant 0 : i32
    return %c0_i32, %c0_i32_0 : i32, i32
  }
  func.func @transform_10(%arg0: i32) -> (i32, i32) {
    %c0_i32 = arith.constant 0 : i32
    %c0_i32_0 = arith.constant 0 : i32
    %c0_i32_1 = arith.constant 0 : i32
    return %c0_i32, %c0_i32_0 : i32, i32
  }
  func.func @transform_11(%arg0: i32) -> (i32, i32) {
    %c0_i32 = arith.constant 0 : i32
    %c0_i32_0 = arith.constant 0 : i32
    %c0_i32_1 = arith.constant 0 : i32
    return %c0_i32, %c0_i32_0 : i32, i32
  }
  func.func @transform_12(%arg0: i32) -> (i32, i32) {
    %c0_i32 = arith.constant 0 : i32
    %c0_i32_0 = arith.constant 0 : i32
    %c0_i32_1 = arith.constant 0 : i32
    return %c0_i32, %c0_i32_0 : i32, i32
  }
  func.func @transform_13(%arg0: i32) -> (i32, i32) {
    %c0_i32 = arith.constant 0 : i32
    %c0_i32_0 = arith.constant 0 : i32
    %c0_i32_1 = arith.constant 0 : i32
    return %c0_i32, %c0_i32_0 : i32, i32
  }
  func.func @transform_14(%arg0: i32) -> (i32, i32) {
    %c0_i32 = arith.constant 0 : i32
    %c0_i32_0 = arith.constant 0 : i32
    %c0_i32_1 = arith.constant 0 : i32
    return %c0_i32, %c0_i32_0 : i32, i32
  }
  func.func @transform_15(%arg0: i32) -> (i32, i32) {
    %c0_i32 = arith.constant 0 : i32
    %c0_i32_0 = arith.constant 0 : i32
    %c0_i32_1 = arith.constant 0 : i32
    return %c0_i32, %c0_i32_0 : i32, i32
  }
  func.func @transform_16(%arg0: i32) -> (i32, i32, i32) {
    %c0_i32 = arith.constant 0 : i32
    %c0_i32_0 = arith.constant 0 : i32
    %c0_i32_1 = arith.constant 0 : i32
    return %arg0, %c0_i32, %c0_i32_0 : i32, i32, i32
  }
  func.func @transform_17(%arg0: i32) -> (i32, i32, i32) {
    %c0_i32 = arith.constant 0 : i32
    %c0_i32_0 = arith.constant 0 : i32
    %c0_i32_1 = arith.constant 0 : i32
    return %arg0, %c0_i32, %c0_i32_0 : i32, i32, i32
  }
  func.func @transform_18(%arg0: i32) -> (i32, i32, i32) {
    %c0_i32 = arith.constant 0 : i32
    %c0_i32_0 = arith.constant 0 : i32
    %c0_i32_1 = arith.constant 0 : i32
    return %arg0, %c0_i32, %c0_i32_0 : i32, i32, i32
  }
  func.func @transform_19(%arg0: i32) -> (i32, i32, i32) {
    %c0_i32 = arith.constant 0 : i32
    %c0_i32_0 = arith.constant 0 : i32
    %c0_i32_1 = arith.constant 0 : i32
    return %arg0, %c0_i32, %c0_i32_0 : i32, i32, i32
  }
  func.func @transform_20(%arg0: i32) -> (i32, i32, i32) {
    %c0_i32 = arith.constant 0 : i32
    %c0_i32_0 = arith.constant 0 : i32
    %c0_i32_1 = arith.constant 0 : i32
    return %arg0, %c0_i32, %c0_i32_0 : i32, i32, i32
  }
  func.func @transform_21(%arg0: i32) -> (i32, i32, i32) {
    %c0_i32 = arith.constant 0 : i32
    %c0_i32_0 = arith.constant 0 : i32
    %c0_i32_1 = arith.constant 0 : i32
    return %arg0, %c0_i32, %c0_i32_0 : i32, i32, i32
  }
  func.func @transform_22(%arg0: i32) -> (i32, i32, i32) {
    %c0_i32 = arith.constant 0 : i32
    %c0_i32_0 = arith.constant 0 : i32
    %c0_i32_1 = arith.constant 0 : i32
    return %arg0, %c0_i32, %c0_i32_0 : i32, i32, i32
  }
}

</mosaic_0001>

<llo_original>
// kernel: tpu_custom_call.1
$region0: #{tpu_custom_call.1}
  #allocation0 [shape = 'u32[]', space=smem, size = 0x4, offset = 0x4, fixed_abs, tag = 'smem constant byte address 0x4 - core index']
  #allocation1 [shape = 'u32[72,128]{1,0:T(1,128)}', space=vmem, size = 0x9000, scoped, tag = 'internal scratch']
  %s0 = inlined_call_operand.hbm [shape: f32[8,128], index: 0, kind: input, shape index: {}]
  %s1 = inlined_call_operand.hbm [shape: f32[8,128], index: 1, kind: output, shape index: {}]
  %s2 = sld [smem:[#allocation0]]
  $region18: #{tpu_custom_call.1} parent=0
    _
  %s4 = ssub.s32 1, %s2
  %s5 = scalar_select 0, %s4, %s2
  $region1: #{tpu_custom_call.1} parent=0
    #allocation2 [shape = 'u8[4096]{0}', space=vmem, size = 0x1000, scoped, tag = 'input window, operand 0, single buffered']
    #allocation3 [shape = 's32[1]{0}', space=sflag, size = 0x4, scoped, tag = 'scoped memory for tpu_custom_call.1']
    #allocation4 [shape = 's32[1]{0}', space=sflag, size = 0x4, scoped, tag = 'scoped memory for tpu_custom_call.1']
    #allocation5 [shape = 'u8[4096]{0}', space=vmem, size = 0x1000, scoped, tag = 'output window, operand 0, single buffered']
    %6 = vsyncpa [#allocation3], 0
    %7 = vsyncpa [#allocation4], 0
    // Predicated region
    $region2: #{tpu_custom_call.1} parent=1 // pred_check
      _
    $region3: #{tpu_custom_call.1} parent=1 // pred_check_branch
      %9 = sbr.rel (0) target = $region5
    $region4: #{tpu_custom_call.1} parent=1 // pred_region
      %11 = vsyncadd [#allocation3], 0
      %s13 = sshll.u32 %s0, 4
      %s14 = int_to_ptr.hbm [resolvable:$true] %s13
      %s15 = sshll.u32 [#allocation2], 4
      %s16 = int_to_ptr.vmem [resolvable:$true] %s15
      %18 = dma.hbm_to_vmem [thread:$0]  %s14, 128, %s16, [#allocation3]
    $region5: #{tpu_custom_call.1} parent=1 // pred_fallthru
      _
    // Predicated region
    $region6: #{tpu_custom_call.1} parent=1 // pred_check
      _
    $region7: #{tpu_custom_call.1} parent=1 // pred_check_branch
      %20 = sbr.rel (0) target = $region9
    $region8: #{tpu_custom_call.1} parent=1 // pred_region
      %22 = dma.done [#allocation3], 128
    $region9: #{tpu_custom_call.1} parent=1 // pred_fallthru
      _
    %v23 = vld [vmem:[#allocation2] sm:$0xff]
    %v24 = vadd.f32 %v23, 1.0
    %25 = vst [vmem:[#allocation5] sm:$0xff] %v24
    // Predicated region
    $region10: #{tpu_custom_call.1} parent=1 // pred_check
      _
    $region11: #{tpu_custom_call.1} parent=1 // pred_check_branch
      %27 = sbr.rel (0) target = $region13
    $region12: #{tpu_custom_call.1} parent=1 // pred_region
      %29 = vsyncadd [#allocation4], 0
      %s31 = sshll.u32 [#allocation5], 4
      %s32 = int_to_ptr.vmem [resolvable:$true] %s31
      %s33 = sshll.u32 %s1, 4
      %s34 = int_to_ptr.hbm [resolvable:$true] %s33
      %36 = dma.vmem_to_hbm [thread:$0]  %s32, 128, %s34, [#allocation4]
    $region13: #{tpu_custom_call.1} parent=1 // pred_fallthru
      _
    // Predicated region
    $region14: #{tpu_custom_call.1} parent=1 // pred_check
      _
    $region15: #{tpu_custom_call.1} parent=1 // pred_check_branch
      %38 = sbr.rel (0) target = $region17
    $region16: #{tpu_custom_call.1} parent=1 // pred_region
      %40 = dma.done [#allocation4], 128
    $region17: #{tpu_custom_call.1} parent=1 // pred_fallthru
      _
    %41 = vsyncpa [#allocation3], 1
    %42 = vsyncpa [#allocation4], 1

// kernel: encoder_forward.1
$region0: #{encoder_forward.1}
  #allocation0 [shape = 'u32[]', space=smem, size = 0x4, offset = 0x4, fixed_abs, tag = 'smem constant byte address 0x4 - core index']
  #allocation1 [shape = 'u32[72,128]{1,0:T(1,128)}', space=vmem, size = 0x9000, scoped, tag = 'internal scratch']
  %s0 = inlined_call_operand.vmem [shape: f32[2,8,32], index: 0, kind: input, shape index: {}]
  %s1 = inlined_call_operand.vmem [shape: f32[2,8,32], index: 1, kind: input, shape index: {}]
  %s2 = inlined_call_operand.vmem [shape: f32[2,8,1], index: 2, kind: input, shape index: {}]
  %s3 = inlined_call_operand.vmem [shape: f32[1,32], index: 3, kind: input, shape index: {}]
  %s4 = inlined_call_operand.vmem [shape: f32[1,32], index: 4, kind: input, shape index: {}]
  %s5 = inlined_call_operand.hbm [shape: f32[2,8,32], index: 5, kind: output, shape index: {}]
  %s6 = sld [smem:[#allocation0]]
  $region53: #{encoder_forward.1} parent=0
    _
  %s8 = ssub.s32 1, %s6
  %s9 = scalar_select 0, %s8, %s6
  $region1: #{encoder_forward.1} parent=0
    #allocation2 [shape = 'u8[8192]{0}', space=vmem, size = 0x2000, scoped, tag = 'output window, operand 0']
    #allocation3 [shape = 's32[2]{0}', space=sflag, size = 0x8, scoped, tag = 'scoped memory for encoder_forward.1']
    %10 = vsyncpa [#allocation3], 0
    %s11 = scalar_lea.sflag [#allocation3], 1
    %12 = vsyncpa %s11, 0
    loop: start=0, step=1, limit=4
    $region2: #{encoder_forward.1} parent=1 // loop_pre_header
      _
    $region3: #{encoder_forward.1} parent=1 // loop_header
      %s14 = sphi 0, %s18
      %p15 = scmp.ge.s32.totalorder %s14, 4
      %s24 = sphi 0, %s26
      %s27 = sphi 0, %s24
      %s28 = sphi 0, %s27
      %s44 = sphi 0, %s28
      %s50 = sphi 0, %s52
      %s53 = sphi 0, %s50
      %s54 = sphi 0, %s53
      %s70 = sphi 0, %s54
      %s76 = sphi 0, %s78
      %s79 = sphi 0, %s76
      %s80 = sphi 0, %s79
      %s96 = sphi 0, %s80
      %s100 = sphi 0, %s100
      %s102 = sphi 0, %s100
      %s103 = sphi 0, %s102
      %s117 = sphi 0, %s103
      %s121 = sphi 0, %s121
      %s123 = sphi 0, %s121
      %s124 = sphi 0, %s123
      %s138 = sphi 0, %s124
      %s144 = sphi 0, %s146
      %s147 = sphi 0, %s144
      %s148 = sphi 0, %s147
      %s164 = sphi 0, %s148
    $region4: #{encoder_forward.1} parent=1 // loop_header_branch
      %17 = sbr.rel (%p15) target = $region8
    $region5: #{encoder_forward.1} parent=1 // loop_body
      %s19 = ssub.s32 %s14, 1
      %s20 = ssub.s32 %s14, 2
      %s21 = sadd.s32 %s14, 1
      %s22 = ssub.s32 %s14, %s21
      %p23 = scmp.eq.s32.totalorder %s22, 0
      %s25 = sadd.s32 %s24, 1
      %s26 = scalar_select %p23, %s24, %s25
      %p29 = pneg %p23
      %p30 = scmp.eq.s32.totalorder %s14, 1
      %p31 = por %p29, %p30
      %p32 = scmp.ne.s32.totalorder %s24, %s27
      %p33 = scmp.eq.s32.totalorder %s14, 0
      %p34 = por %p32, %p33
      %p35 = scmp.ne.s32.totalorder %s24, %s27
      %p36 = scmp.eq.s32.totalorder %s19, 1
      %p37 = por %p35, %p36
      %p38 = scmp.ne.s32.totalorder %s27, %s28
      %p39 = scmp.eq.s32.totalorder %s19, 0
      %p40 = por %p38, %p39
      %p41 = scmp.ne.s32.totalorder %s27, %s28
      %p42 = scmp.eq.s32.totalorder %s20, 1
      %p43 = por %p41, %p42
      %p45 = scmp.ne.s32.totalorder %s28, %s44
      %p46 = scmp.eq.s32.totalorder %s20, 0
      %p47 = por %p45, %p46
      %s48 = ssub.s32 %s14, %s21
      %p49 = scmp.eq.s32.totalorder %s48, 0
      %s51 = sadd.s32 %s50, 1
      %s52 = scalar_select %p49, %s50, %s51
      %p55 = pneg %p49
      %p56 = scmp.eq.s32.totalorder %s14, 1
      %p57 = por %p55, %p56
      %p58 = scmp.ne.s32.totalorder %s50, %s53
      %p59 = scmp.eq.s32.totalorder %s14, 0
      %p60 = por %p58, %p59
      %p61 = scmp.ne.s32.totalorder %s50, %s53
      %p62 = scmp.eq.s32.totalorder %s19, 1
      %p63 = por %p61, %p62
      %p64 = scmp.ne.s32.totalorder %s53, %s54
      %p65 = scmp.eq.s32.totalorder %s19, 0
      %p66 = por %p64, %p65
      %p67 = scmp.ne.s32.totalorder %s53, %s54
      %p68 = scmp.eq.s32.totalorder %s20, 1
      %p69 = por %p67, %p68
      %p71 = scmp.ne.s32.totalorder %s54, %s70
      %p72 = scmp.eq.s32.totalorder %s20, 0
      %p73 = por %p71, %p72
      %s74 = ssub.s32 %s14, %s21
      %p75 = scmp.eq.s32.totalorder %s74, 0
      %s77 = sadd.s32 %s76, 1
      %s78 = scalar_select %p75, %s76, %s77
      %p81 = pneg %p75
      %p82 = scmp.eq.s32.totalorder %s14, 1
      %p83 = por %p81, %p82
      %p84 = scmp.ne.s32.totalorder %s76, %s79
      %p85 = scmp.eq.s32.totalorder %s14, 0
      %p86 = por %p84, %p85
      %p87 = scmp.ne.s32.totalorder %s76, %s79
      %p88 = scmp.eq.s32.totalorder %s19, 1
      %p89 = por %p87, %p88
      %p90 = scmp.ne.s32.totalorder %s79, %s80
      %p91 = scmp.eq.s32.totalorder %s19, 0
      %p92 = por %p90, %p91
      %p93 = scmp.ne.s32.totalorder %s79, %s80
      %p94 = scmp.eq.s32.totalorder %s20, 1
      %p95 = por %p93, %p94
      %p97 = scmp.ne.s32.totalorder %s80, %s96
      %p98 = scmp.eq.s32.totalorder %s20, 0
      %p99 = por %p97, %p98
      %s101 = sadd.s32 %s100, 1
      %p104 = scmp.eq.s32.totalorder %s14, 1
      %p105 = scmp.ne.s32.totalorder %s100, %s102
      %p106 = scmp.eq.s32.totalorder %s14, 0
      %p107 = por %p105, %p106
      %p108 = scmp.ne.s32.totalorder %s100, %s102
      %p109 = scmp.eq.s32.totalorder %s19, 1
      %p110 = por %p108, %p109
      %p111 = scmp.ne.s32.totalorder %s102, %s103
      %p112 = scmp.eq.s32.totalorder %s19, 0
      %p113 = por %p111, %p112
      %p114 = scmp.ne.s32.totalorder %s102, %s103
      %p115 = scmp.eq.s32.totalorder %s20, 1
      %p116 = por %p114, %p115
      %p118 = scmp.ne.s32.totalorder %s103, %s117
      %p119 = scmp.eq.s32.totalorder %s20, 0
      %p120 = por %p118, %p119
      %s122 = sadd.s32 %s121, 1
      %p125 = scmp.eq.s32.totalorder %s14, 1
      %p126 = scmp.ne.s32.totalorder %s121, %s123
      %p127 = scmp.eq.s32.totalorder %s14, 0
      %p128 = por %p126, %p127
      %p129 = scmp.ne.s32.totalorder %s121, %s123
      %p130 = scmp.eq.s32.totalorder %s19, 1
      %p131 = por %p129, %p130
      %p132 = scmp.ne.s32.totalorder %s123, %s124
      %p133 = scmp.eq.s32.totalorder %s19, 0
      %p134 = por %p132, %p133
      %p135 = scmp.ne.s32.totalorder %s123, %s124
      %p136 = scmp.eq.s32.totalorder %s20, 1
      %p137 = por %p135, %p136
      %p139 = scmp.ne.s32.totalorder %s124, %s138
      %p140 = scmp.eq.s32.totalorder %s20, 0
      %p141 = por %p139, %p140
      %s142 = ssub.s32 %s14, %s21
      %p143 = scmp.eq.s32.totalorder %s142, 0
      %s145 = sadd.s32 %s144, 1
      %s146 = scalar_select %p143, %s144, %s145
      %p149 = pneg %p143
      %p150 = scmp.eq.s32.totalorder %s14, 1
      %p151 = por %p149, %p150
      %p152 = scmp.ne.s32.totalorder %s144, %s147
      %p153 = scmp.eq.s32.totalorder %s14, 0
      %p154 = por %p152, %p153
      %p155 = scmp.ne.s32.totalorder %s144, %s147
      %p156 = scmp.eq.s32.totalorder %s19, 1
      %p157 = por %p155, %p156
      %p158 = scmp.ne.s32.totalorder %s147, %s148
      %p159 = scmp.eq.s32.totalorder %s19, 0
      %p160 = por %p158, %p159
      %p161 = scmp.ne.s32.totalorder %s147, %s148
      %p162 = scmp.eq.s32.totalorder %s20, 1
      %p163 = por %p161, %p162
      %p165 = scmp.ne.s32.totalorder %s148, %s164
      %p166 = scmp.eq.s32.totalorder %s20, 0
      %p167 = por %p165, %p166
      %p168 = scmp.le.s32.totalorder 1, %s14
      %p169 = scmp.lt.s32.totalorder %s14, 3
      %p170 = pnand %p168, %p169
      %p171 = pneg %p170
      // Predicated region
      $region9: #{encoder_forward.1} parent=5 // pred_check
        _
      $region10: #{encoder_forward.1} parent=5 // pred_check_branch
        %173 = sbr.rel (%p170) target = $region12
      $region11: #{encoder_forward.1} parent=5 // pred_region
        %s174 = ssub.s32 %s14, 1
        // Predicated region
        $region13: #{encoder_forward.1} parent=11 // pred_check
          %p175 = pneg %p113
        $region14: #{encoder_forward.1} parent=11 // pred_check_branch
          %177 = sbr.rel (%p175) target = $region16
        $region15: #{encoder_forward.1} parent=11 // pred_region
          _
        $region16: #{encoder_forward.1} parent=11 // pred_fallthru
          _
        // Predicated region
        $region17: #{encoder_forward.1} parent=11 // pred_check
          %p178 = pneg %p134
        $region18: #{encoder_forward.1} parent=11 // pred_check_branch
          %180 = sbr.rel (%p178) target = $region20
        $region19: #{encoder_forward.1} parent=11 // pred_region
          _
        $region20: #{encoder_forward.1} parent=11 // pred_fallthru
          _
      $region12: #{encoder_forward.1} parent=5 // pred_fallthru
        _
      %p181 = scmp.lt.s32.totalorder %s14, 2
      // Predicated region
      $region21: #{encoder_forward.1} parent=5 // pred_check
        %p182 = pneg %p181
      $region22: #{encoder_forward.1} parent=5 // pred_check_branch
        %184 = sbr.rel (%p182) target = $region24
      $region23: #{encoder_forward.1} parent=5 // pred_region
        // Predicated region
        $region25: #{encoder_forward.1} parent=23 // pred_check
          %p185 = pneg %p34
        $region26: #{encoder_forward.1} parent=23 // pred_check_branch
          %187 = sbr.rel (%p185) target = $region28
        $region27: #{encoder_forward.1} parent=23 // pred_region
          %p188 = scmp.lt.s32.totalorder %s14, 1
          %s189 = scalar_select %p188, %s14, 1
          %s190 = smul.addr %s189, 8
          %s191 = scalar_lea.vmem %s0, %s190
        $region28: #{encoder_forward.1} parent=23 // pred_fallthru
          _
        // Predicated region
        $region29: #{encoder_forward.1} parent=23 // pred_check
          %p192 = pneg %p60
        $region30: #{encoder_forward.1} parent=23 // pred_check_branch
          %194 = sbr.rel (%p192) target = $region32
        $region31: #{encoder_forward.1} parent=23 // pred_region
          %p195 = scmp.lt.s32.totalorder %s14, 1
          %s196 = scalar_select %p195, %s14, 1
          %s197 = smul.addr %s196, 8
          %s198 = scalar_lea.vmem %s1, %s197
        $region32: #{encoder_forward.1} parent=23 // pred_fallthru
          _
        // Predicated region
        $region33: #{encoder_forward.1} parent=23 // pred_check
          %p199 = pneg %p86
        $region34: #{encoder_forward.1} parent=23 // pred_check_branch
          %201 = sbr.rel (%p199) target = $region36
        $region35: #{encoder_forward.1} parent=23 // pred_region
          %p202 = scmp.lt.s32.totalorder %s14, 1
          %s203 = scalar_select %p202, %s14, 1
          %s204 = smul.addr %s203, 8
          %s205 = scalar_lea.vmem %s2, %s204
        $region36: #{encoder_forward.1} parent=23 // pred_fallthru
          _
      $region24: #{encoder_forward.1} parent=5 // pred_fallthru
        _
      %p206 = scmp.le.s32.totalorder 1, %s14
      %p207 = scmp.lt.s32.totalorder %s14, 3
      %p208 = pnand %p206, %p207
      %p209 = pneg %p208
      // Predicated region
      $region37: #{encoder_forward.1} parent=5 // pred_check
        _
      $region38: #{encoder_forward.1} parent=5 // pred_check_branch
        %211 = sbr.rel (%p208) target = $region40
      $region39: #{encoder_forward.1} parent=5 // pred_region
        %s212 = ssub.s32 %s14, 1
        %p213 = scmp.lt.s32.totalorder %s19, 1
        %s214 = scalar_select %p213, %s19, 1
        %s215 = smul.addr %s214, 8
        %s216 = scalar_lea.vmem %s0, %s215
        %p217 = pneg %p40
        %p218 = pneg %p37
        %p219 = scmp.lt.s32.totalorder %s19, 1
        %s220 = scalar_select %p219, %s19, 1
        %s221 = smul.addr %s220, 8
        %s222 = scalar_lea.vmem %s1, %s221
        %p223 = pneg %p66
        %p224 = pneg %p63
        %p225 = scmp.lt.s32.totalorder %s19, 1
        %s226 = scalar_select %p225, %s19, 1
        %s227 = smul.addr %s226, 8
        %s228 = scalar_lea.vmem %s2, %s227
        %p229 = pneg %p92
        %p230 = pneg %p89
        %p231 = pneg %p113
        %p232 = pneg %p110
        %p233 = pneg %p134
        %p234 = pneg %p131
        %p235 = pneg %p160
        %p236 = pneg %p157
        %s237 = sand.u32 %s147, 1
        %s238 = scalar_lea.sflag [#allocation3], %s237
        %s239 = sand.u32 %s147, 1
        %s240 = smul.addr %s239, 8
        %s241 = scalar_lea.vmem [#allocation2], %s240
        %p242 = scmp.lt.s32.totalorder %s19, 1
        %s243 = scalar_select %p242, %s19, 1
        %s244 = smul.addr %s243, 8
        %s245 = scalar_lea.vmem %s0, %s244
        %p246 = scmp.lt.s32.totalorder %s19, 1
        %s247 = scalar_select %p246, %s19, 1
        %s248 = smul.addr %s247, 8
        %s249 = scalar_lea.vmem %s1, %s248
        %p250 = scmp.lt.s32.totalorder %s19, 1
        %s251 = scalar_select %p250, %s19, 1
        %s252 = smul.addr %s251, 8
        %s253 = scalar_lea.vmem %s2, %s252
        %v254 = vld [vmem:[%s245] sm:$0xff]
        %v255 = vld [vmem:[%s253] sm:$0xff]
        %v256 = vsub.f32 1.0, %v255
        %v257 = vld [vmem:[%s249] sm:$0xff]
        %259 = vset.pattern.permute.xlu0 0
        %260 = vperm.xlu0 %259, %v256
        %v261 = vpop.permute.xlu0 %260
        %v263 = vmul.f32 %v261, %v257
        %v264 = vadd.f32 %v254, %v263
        %vm265 = vcmask 261120
        %v266 = vsel %vm265, %v264, 0.0
        %267 = vadd.xlane.f32.xlu0 %v266
        %v268 = vpop.xlane.xlu0 %267
        %v269 = vrcp.pop 32.0
        %v270 = vmul.f32 32.0, %v269
        %v271 = vsub.f32 1.0, %v270
        %v272 = vmul.f32 %v269, %v271
        %v273 = vadd.f32 %v269, %v272
        %vm274 = vweird.f32 %v269
        %v275 = vsel %vm274, %v269, %v273
        %v276 = vmul.f32 %v268, %v275
        %v277 = vsub.f32 %v264, %v276
        %v278 = vmul.f32 %v277, %v277
        %v279 = vsel %vm265, %v278, 0.0
        %280 = vadd.xlane.f32.xlu0 %v279
        %v281 = vpop.xlane.xlu0 %280
        %v282 = vmul.f32 %v281, %v275
        %v283 = vadd.f32 %v282, 1e-06
        %v284 = vrsqrt.pop %v283
        %v285 = vmul.f32 %v284, %v283
        %v286 = vmul.f32 %v285, %v284
        %v287 = vmul.f32 0.5, %v286
        %v288 = vsub.f32 1.5, %v287
        %v289 = vmul.f32 %v284, %v288
        %vm290 = vweird.f32 %v283
        %vm291 = vweird.f32 %v284
        %vm292 = vmor %vm290, %vm291
        %v293 = vsel %vm292, %v284, %v289
        %v294 = vmul.f32 %v277, %v293
        %v295 = vld [vmem:[%s3] sm:$0x1]
        %v297 = vperm.slane %v295, 0
        %v299 = vmul.f32 %v294, %v297
        %v300 = vld [vmem:[%s4] sm:$0x1]
        %v302 = vperm.slane %v300, 0
        %v304 = vadd.f32 %v299, %v302
        %305 = vst.msk [vmem:[%s241] sm:$0xff] %vm265, %v304
        %s306 = sand.u32 %s147, 1
        %s307 = scalar_lea.sflag [#allocation3], %s306
        %s308 = sand.u32 %s147, 1
        %s309 = smul.addr %s308, 8
        %s310 = scalar_lea.vmem [#allocation2], %s309
        // Predicated region
        $region41: #{encoder_forward.1} parent=39 // pred_check
          %p311 = pneg %p157
        $region42: #{encoder_forward.1} parent=39 // pred_check_branch
          %313 = sbr.rel (%p311) target = $region44
        $region43: #{encoder_forward.1} parent=39 // pred_region
          %315 = vsyncadd %s307, 0
          %s316 = smul.addr %s19, 8
          %s317 = scalar_lea.hbm %s5, %s316
          %s319 = sshll.u32 %s310, 4
          %s320 = int_to_ptr.vmem [resolvable:$true] %s319
          %s321 = sshll.u32 %s317, 4
          %s322 = int_to_ptr.hbm [resolvable:$true] %s321
          %324 = dma.vmem_to_hbm [thread:$0]  %s320, 128, %s322, %s307
        $region44: #{encoder_forward.1} parent=39 // pred_fallthru
          _
      $region40: #{encoder_forward.1} parent=5 // pred_fallthru
        _
      %p325 = scmp.le.s32.totalorder 2, %s14
      // Predicated region
      $region45: #{encoder_forward.1} parent=5 // pred_check
        %p326 = pneg %p325
      $region46: #{encoder_forward.1} parent=5 // pred_check_branch
        %328 = sbr.rel (%p326) target = $region48
      $region47: #{encoder_forward.1} parent=5 // pred_region
        %s329 = ssub.s32 %s14, 2
        // Predicated region
        $region49: #{encoder_forward.1} parent=47 // pred_check
          %p330 = pneg %p163
        $region50: #{encoder_forward.1} parent=47 // pred_check_branch
          %332 = sbr.rel (%p330) target = $region52
        $region51: #{encoder_forward.1} parent=47 // pred_region
          %s333 = sand.u32 %s148, 1
          %s334 = scalar_lea.sflag [#allocation3], %s333
          %s335 = sand.u32 %s148, 1
          %s336 = smul.addr %s335, 8
          %s337 = scalar_lea.vmem [#allocation2], %s336
          %339 = dma.done %s334, 128
        $region52: #{encoder_forward.1} parent=47 // pred_fallthru
          _
      $region48: #{encoder_forward.1} parent=5 // pred_fallthru
        _
    $region6: #{encoder_forward.1} parent=1 // loop_footer
      %s18 = sadd.s32 1, %s14
    $region7: #{encoder_forward.1} parent=1 // loop_footer_branch
      %13 = sbr.rel target = $region3
    $region8: #{encoder_forward.1} parent=1 // loop_exit
      _
    %340 = vsyncpa [#allocation3], 1
    %s341 = scalar_lea.sflag [#allocation3], 1
    %342 = vsyncpa %s341, 1

// kernel: body.3
$region0: #{body.3}
  #allocation0 [shape = 'u32[]', space=smem, size = 0x4, offset = 0x4, fixed_abs, tag = 'smem constant byte address 0x4 - core index']
  #allocation1 [shape = 'u32[72,128]{1,0:T(1,128)}', space=vmem, size = 0x9000, scoped, tag = 'internal scratch']
  #allocation2 [shape = 'f32[8,32]{1,0:T(8,128)}', space=vmem, size = 0x1000, scoped, tag = 'scratch operand']
  #allocation3 [shape = 'f32[1,1]{1,0:T(1,128)S(1)}', space=vmem, size = 0x200, scoped, tag = 'scoped memory for body.3']
  %s0 = inlined_call_operand.vmem [shape: f32[2,8,32], index: 0, kind: input, shape index: {}]
  %s1 = inlined_call_operand.vmem [shape: f32[8,32], index: 1, kind: input, shape index: {}]
  %s2 = inlined_call_operand.vmem [shape: f32[1,32], index: 2, kind: input, shape index: {}]
  %s3 = inlined_call_operand.vmem [shape: f32[1,32], index: 3, kind: input, shape index: {}]
  %s4 = inlined_call_operand.vmem [shape: bf16[32,96], index: 4, kind: input, shape index: {}]
  %s5 = inlined_call_operand.vmem [shape: f32[1,96], index: 5, kind: input, shape index: {}]
  %s6 = inlined_call_operand.vmem [shape: bf16[32,32], index: 6, kind: input, shape index: {}]
  %s7 = inlined_call_operand.vmem [shape: f32[1,32], index: 7, kind: input, shape index: {}]
  %s8 = inlined_call_operand.vmem [shape: f32[1,32], index: 8, kind: input, shape index: {}]
  %s9 = inlined_call_operand.vmem [shape: f32[1,32], index: 9, kind: input, shape index: {}]
  %s10 = inlined_call_operand.vmem [shape: bf16[32,128], index: 10, kind: input, shape index: {}]
  %s11 = inlined_call_operand.vmem [shape: f32[1,128], index: 11, kind: input, shape index: {}]
  %s12 = inlined_call_operand.vmem [shape: bf16[128,32], index: 12, kind: input, shape index: {}]
  %s13 = inlined_call_operand.vmem [shape: f32[1,32], index: 13, kind: input, shape index: {}]
  %s14 = inlined_call_operand.vmem [shape: f32[1,32], index: 14, kind: input, shape index: {}]
  %s15 = inlined_call_operand.<no memory space> [shape: f32[1,1], index: 15, kind: input, shape index: {}]
  %s16 = inlined_call_operand.vmem [shape: f32[2,8,1], index: 16, kind: input, shape index: {}, may-alias: {16,21}]
  %s17 = inlined_call_operand.vmem [shape: f32[2,8,32], index: 17, kind: input, shape index: {}, may-alias: {17,20}]
  %s18 = inlined_call_operand.hbm [shape: f32[2,8,1], index: 18, kind: input, shape index: {}, may-alias: {18,22}]
  %s19 = inlined_call_operand.vmem [shape: f32[2,8,32], index: 19, kind: output, shape index: {0}]
  %s20 = inlined_call_operand.vmem [shape: f32[2,8,32], index: 20, kind: output, shape index: {1}, may-alias: {17,20}]
  %s21 = inlined_call_operand.vmem [shape: f32[2,8,1], index: 21, kind: output, shape index: {2}, may-alias: {16,21}]
  %s22 = inlined_call_operand.hbm [shape: f32[2,8,1], index: 22, kind: output, shape index: {3}, may-alias: {18,22}]
  %23 = xla_tuple %s19, %s20, %s21, %s22
  %s24 = sld [smem:[#allocation0]]
  $region137: #{body.3} parent=0
    _
  %s26 = ssub.s32 1, %s24
  %s27 = scalar_select 0, %s26, %s24
  %v28 = vstv %s15
  %29 = vst [vmem:[#allocation3] sm:$0x1] %v28
  $region1: #{body.3} parent=0
    #allocation4 [shape = 'u8[8192]{0}', space=vmem, size = 0x2000, scoped, tag = 'input window, operand 18']
    #allocation5 [shape = 's32[2]{0}', space=sflag, size = 0x8, scoped, tag = 'scoped memory for body.3']
    #allocation6 [shape = 's32[2]{0}', space=sflag, size = 0x8, scoped, tag = 'scoped memory for body.3']
    #allocation7 [shape = 'u8[8192]{0}', space=vmem, size = 0x2000, scoped, tag = 'output window, operand 3']
    %30 = vsyncpa [#allocation5], 0
    %s31 = scalar_lea.sflag [#allocation5], 1
    %32 = vsyncpa %s31, 0
    %33 = vsyncpa [#allocation6], 0
    %s34 = scalar_lea.sflag [#allocation6], 1
    %35 = vsyncpa %s34, 0
    loop: start=0, step=1, limit=4
    $region2: #{body.3} parent=1 // loop_pre_header
      _
    $region3: #{body.3} parent=1 // loop_header
      %s37 = sphi 0, %s41
      %p38 = scmp.ge.s32.totalorder %s37, 4
      %s47 = sphi 0, %s49
      %s50 = sphi 0, %s47
      %s51 = sphi 0, %s50
      %s67 = sphi 0, %s51
      %s71 = sphi 0, %s71
      %s73 = sphi 0, %s71
      %s74 = sphi 0, %s73
      %s88 = sphi 0, %s74
      %s92 = sphi 0, %s92
      %s94 = sphi 0, %s92
      %s95 = sphi 0, %s94
      %s109 = sphi 0, %s95
      %s113 = sphi 0, %s113
      %s115 = sphi 0, %s113
      %s116 = sphi 0, %s115
      %s130 = sphi 0, %s116
      %s134 = sphi 0, %s134
      %s136 = sphi 0, %s134
      %s137 = sphi 0, %s136
      %s151 = sphi 0, %s137
      %s155 = sphi 0, %s155
      %s157 = sphi 0, %s155
      %s158 = sphi 0, %s157
      %s172 = sphi 0, %s158
      %s176 = sphi 0, %s176
      %s178 = sphi 0, %s176
      %s179 = sphi 0, %s178
      %s193 = sphi 0, %s179
      %s197 = sphi 0, %s197
      %s199 = sphi 0, %s197
      %s200 = sphi 0, %s199
      %s214 = sphi 0, %s200
      %s218 = sphi 0, %s218
      %s220 = sphi 0, %s218
      %s221 = sphi 0, %s220
      %s235 = sphi 0, %s221
      %s239 = sphi 0, %s239
      %s241 = sphi 0, %s239
      %s242 = sphi 0, %s241
      %s256 = sphi 0, %s242
      %s260 = sphi 0, %s260
      %s262 = sphi 0, %s260
      %s263 = sphi 0, %s262
      %s277 = sphi 0, %s263
      %s281 = sphi 0, %s281
      %s283 = sphi 0, %s281
      %s284 = sphi 0, %s283
      %s298 = sphi 0, %s284
      %s302 = sphi 0, %s302
      %s304 = sphi 0, %s302
      %s305 = sphi 0, %s304
      %s319 = sphi 0, %s305
      %s323 = sphi 0, %s323
      %s325 = sphi 0, %s323
      %s326 = sphi 0, %s325
      %s340 = sphi 0, %s326
      %s344 = sphi 0, %s344
      %s346 = sphi 0, %s344
      %s347 = sphi 0, %s346
      %s361 = sphi 0, %s347
      %s365 = sphi 0, %s365
      %s367 = sphi 0, %s365
      %s368 = sphi 0, %s367
      %s382 = sphi 0, %s368
      %s388 = sphi 0, %s390
      %s391 = sphi 0, %s388
      %s392 = sphi 0, %s391
      %s408 = sphi 0, %s392
      %s414 = sphi 0, %s416
      %s417 = sphi 0, %s414
      %s418 = sphi 0, %s417
      %s434 = sphi 0, %s418
      %s440 = sphi 0, %s442
      %s443 = sphi 0, %s440
      %s444 = sphi 0, %s443
      %s460 = sphi 0, %s444
      %s466 = sphi 0, %s468
      %s469 = sphi 0, %s466
      %s470 = sphi 0, %s469
      %s486 = sphi 0, %s470
      %s492 = sphi 0, %s494
      %s495 = sphi 0, %s492
      %s496 = sphi 0, %s495
      %s512 = sphi 0, %s496
      %s518 = sphi 0, %s520
      %s521 = sphi 0, %s518
      %s522 = sphi 0, %s521
      %s538 = sphi 0, %s522
      %s544 = sphi 0, %s546
      %s547 = sphi 0, %s544
      %s548 = sphi 0, %s547
      %s564 = sphi 0, %s548
    $region4: #{body.3} parent=1 // loop_header_branch
      %40 = sbr.rel (%p38) target = $region8
    $region5: #{body.3} parent=1 // loop_body
      %s42 = ssub.s32 %s37, 1
      %s43 = ssub.s32 %s37, 2
      %s44 = sadd.s32 %s37, 1
      %s45 = ssub.s32 %s37, %s44
      %p46 = scmp.eq.s32.totalorder %s45, 0
      %s48 = sadd.s32 %s47, 1
      %s49 = scalar_select %p46, %s47, %s48
      %p52 = pneg %p46
      %p53 = scmp.eq.s32.totalorder %s37, 1
      %p54 = por %p52, %p53
      %p55 = scmp.ne.s32.totalorder %s47, %s50
      %p56 = scmp.eq.s32.totalorder %s37, 0
      %p57 = por %p55, %p56
      %p58 = scmp.ne.s32.totalorder %s47, %s50
      %p59 = scmp.eq.s32.totalorder %s42, 1
      %p60 = por %p58, %p59
      %p61 = scmp.ne.s32.totalorder %s50, %s51
      %p62 = scmp.eq.s32.totalorder %s42, 0
      %p63 = por %p61, %p62
      %p64 = scmp.ne.s32.totalorder %s50, %s51
      %p65 = scmp.eq.s32.totalorder %s43, 1
      %p66 = por %p64, %p65
      %p68 = scmp.ne.s32.totalorder %s51, %s67
      %p69 = scmp.eq.s32.totalorder %s43, 0
      %p70 = por %p68, %p69
      %s72 = sadd.s32 %s71, 1
      %p75 = scmp.eq.s32.totalorder %s37, 1
      %p76 = scmp.ne.s32.totalorder %s71, %s73
      %p77 = scmp.eq.s32.totalorder %s37, 0
      %p78 = por %p76, %p77
      %p79 = scmp.ne.s32.totalorder %s71, %s73
      %p80 = scmp.eq.s32.totalorder %s42, 1
      %p81 = por %p79, %p80
      %p82 = scmp.ne.s32.totalorder %s73, %s74
      %p83 = scmp.eq.s32.totalorder %s42, 0
      %p84 = por %p82, %p83
      %p85 = scmp.ne.s32.totalorder %s73, %s74
      %p86 = scmp.eq.s32.totalorder %s43, 1
      %p87 = por %p85, %p86
      %p89 = scmp.ne.s32.totalorder %s74, %s88
      %p90 = scmp.eq.s32.totalorder %s43, 0
      %p91 = por %p89, %p90
      %s93 = sadd.s32 %s92, 1
      %p96 = scmp.eq.s32.totalorder %s37, 1
      %p97 = scmp.ne.s32.totalorder %s92, %s94
      %p98 = scmp.eq.s32.totalorder %s37, 0
      %p99 = por %p97, %p98
      %p100 = scmp.ne.s32.totalorder %s92, %s94
      %p101 = scmp.eq.s32.totalorder %s42, 1
      %p102 = por %p100, %p101
      %p103 = scmp.ne.s32.totalorder %s94, %s95
      %p104 = scmp.eq.s32.totalorder %s42, 0
      %p105 = por %p103, %p104
      %p106 = scmp.ne.s32.totalorder %s94, %s95
      %p107 = scmp.eq.s32.totalorder %s43, 1
      %p108 = por %p106, %p107
      %p110 = scmp.ne.s32.totalorder %s95, %s109
      %p111 = scmp.eq.s32.totalorder %s43, 0
      %p112 = por %p110, %p111
      %s114 = sadd.s32 %s113, 1
      %p117 = scmp.eq.s32.totalorder %s37, 1
      %p118 = scmp.ne.s32.totalorder %s113, %s115
      %p119 = scmp.eq.s32.totalorder %s37, 0
      %p120 = por %p118, %p119
      %p121 = scmp.ne.s32.totalorder %s113, %s115
      %p122 = scmp.eq.s32.totalorder %s42, 1
      %p123 = por %p121, %p122
      %p124 = scmp.ne.s32.totalorder %s115, %s116
      %p125 = scmp.eq.s32.totalorder %s42, 0
      %p126 = por %p124, %p125
      %p127 = scmp.ne.s32.totalorder %s115, %s116
      %p128 = scmp.eq.s32.totalorder %s43, 1
      %p129 = por %p127, %p128
      %p131 = scmp.ne.s32.totalorder %s116, %s130
      %p132 = scmp.eq.s32.totalorder %s43, 0
      %p133 = por %p131, %p132
      %s135 = sadd.s32 %s134, 1
      %p138 = scmp.eq.s32.totalorder %s37, 1
      %p139 = scmp.ne.s32.totalorder %s134, %s136
      %p140 = scmp.eq.s32.totalorder %s37, 0
      %p141 = por %p139, %p140
      %p142 = scmp.ne.s32.totalorder %s134, %s136
      %p143 = scmp.eq.s32.totalorder %s42, 1
      %p144 = por %p142, %p143
      %p145 = scmp.ne.s32.totalorder %s136, %s137
      %p146 = scmp.eq.s32.totalorder %s42, 0
      %p147 = por %p145, %p146
      %p148 = scmp.ne.s32.totalorder %s136, %s137
      %p149 = scmp.eq.s32.totalorder %s43, 1
      %p150 = por %p148, %p149
      %p152 = scmp.ne.s32.totalorder %s137, %s151
      %p153 = scmp.eq.s32.totalorder %s43, 0
      %p154 = por %p152, %p153
      %s156 = sadd.s32 %s155, 1
      %p159 = scmp.eq.s32.totalorder %s37, 1
      %p160 = scmp.ne.s32.totalorder %s155, %s157
      %p161 = scmp.eq.s32.totalorder %s37, 0
      %p162 = por %p160, %p161
      %p163 = scmp.ne.s32.totalorder %s155, %s157
      %p164 = scmp.eq.s32.totalorder %s42, 1
      %p165 = por %p163, %p164
      %p166 = scmp.ne.s32.totalorder %s157, %s158
      %p167 = scmp.eq.s32.totalorder %s42, 0
      %p168 = por %p166, %p167
      %p169 = scmp.ne.s32.totalorder %s157, %s158
      %p170 = scmp.eq.s32.totalorder %s43, 1
      %p171 = por %p169, %p170
      %p173 = scmp.ne.s32.totalorder %s158, %s172
      %p174 = scmp.eq.s32.totalorder %s43, 0
      %p175 = por %p173, %p174
      %s177 = sadd.s32 %s176, 1
      %p180 = scmp.eq.s32.totalorder %s37, 1
      %p181 = scmp.ne.s32.totalorder %s176, %s178
      %p182 = scmp.eq.s32.totalorder %s37, 0
      %p183 = por %p181, %p182
      %p184 = scmp.ne.s32.totalorder %s176, %s178
      %p185 = scmp.eq.s32.totalorder %s42, 1
      %p186 = por %p184, %p185
      %p187 = scmp.ne.s32.totalorder %s178, %s179
      %p188 = scmp.eq.s32.totalorder %s42, 0
      %p189 = por %p187, %p188
      %p190 = scmp.ne.s32.totalorder %s178, %s179
      %p191 = scmp.eq.s32.totalorder %s43, 1
      %p192 = por %p190, %p191
      %p194 = scmp.ne.s32.totalorder %s179, %s193
      %p195 = scmp.eq.s32.totalorder %s43, 0
      %p196 = por %p194, %p195
      %s198 = sadd.s32 %s197, 1
      %p201 = scmp.eq.s32.totalorder %s37, 1
      %p202 = scmp.ne.s32.totalorder %s197, %s199
      %p203 = scmp.eq.s32.totalorder %s37, 0
      %p204 = por %p202, %p203
      %p205 = scmp.ne.s32.totalorder %s197, %s199
      %p206 = scmp.eq.s32.totalorder %s42, 1
      %p207 = por %p205, %p206
      %p208 = scmp.ne.s32.totalorder %s199, %s200
      %p209 = scmp.eq.s32.totalorder %s42, 0
      %p210 = por %p208, %p209
      %p211 = scmp.ne.s32.totalorder %s199, %s200
      %p212 = scmp.eq.s32.totalorder %s43, 1
      %p213 = por %p211, %p212
      %p215 = scmp.ne.s32.totalorder %s200, %s214
      %p216 = scmp.eq.s32.totalorder %s43, 0
      %p217 = por %p215, %p216
      %s219 = sadd.s32 %s218, 1
      %p222 = scmp.eq.s32.totalorder %s37, 1
      %p223 = scmp.ne.s32.totalorder %s218, %s220
      %p224 = scmp.eq.s32.totalorder %s37, 0
      %p225 = por %p223, %p224
      %p226 = scmp.ne.s32.totalorder %s218, %s220
      %p227 = scmp.eq.s32.totalorder %s42, 1
      %p228 = por %p226, %p227
      %p229 = scmp.ne.s32.totalorder %s220, %s221
      %p230 = scmp.eq.s32.totalorder %s42, 0
      %p231 = por %p229, %p230
      %p232 = scmp.ne.s32.totalorder %s220, %s221
      %p233 = scmp.eq.s32.totalorder %s43, 1
      %p234 = por %p232, %p233
      %p236 = scmp.ne.s32.totalorder %s221, %s235
      %p237 = scmp.eq.s32.totalorder %s43, 0
      %p238 = por %p236, %p237
      %s240 = sadd.s32 %s239, 1
      %p243 = scmp.eq.s32.totalorder %s37, 1
      %p244 = scmp.ne.s32.totalorder %s239, %s241
      %p245 = scmp.eq.s32.totalorder %s37, 0
      %p246 = por %p244, %p245
      %p247 = scmp.ne.s32.totalorder %s239, %s241
      %p248 = scmp.eq.s32.totalorder %s42, 1
      %p249 = por %p247, %p248
      %p250 = scmp.ne.s32.totalorder %s241, %s242
      %p251 = scmp.eq.s32.totalorder %s42, 0
      %p252 = por %p250, %p251
      %p253 = scmp.ne.s32.totalorder %s241, %s242
      %p254 = scmp.eq.s32.totalorder %s43, 1
      %p255 = por %p253, %p254
      %p257 = scmp.ne.s32.totalorder %s242, %s256
      %p258 = scmp.eq.s32.totalorder %s43, 0
      %p259 = por %p257, %p258
      %s261 = sadd.s32 %s260, 1
      %p264 = scmp.eq.s32.totalorder %s37, 1
      %p265 = scmp.ne.s32.totalorder %s260, %s262
      %p266 = scmp.eq.s32.totalorder %s37, 0
      %p267 = por %p265, %p266
      %p268 = scmp.ne.s32.totalorder %s260, %s262
      %p269 = scmp.eq.s32.totalorder %s42, 1
      %p270 = por %p268, %p269
      %p271 = scmp.ne.s32.totalorder %s262, %s263
      %p272 = scmp.eq.s32.totalorder %s42, 0
      %p273 = por %p271, %p272
      %p274 = scmp.ne.s32.totalorder %s262, %s263
      %p275 = scmp.eq.s32.totalorder %s43, 1
      %p276 = por %p274, %p275
      %p278 = scmp.ne.s32.totalorder %s263, %s277
      %p279 = scmp.eq.s32.totalorder %s43, 0
      %p280 = por %p278, %p279
      %s282 = sadd.s32 %s281, 1
      %p285 = scmp.eq.s32.totalorder %s37, 1
      %p286 = scmp.ne.s32.totalorder %s281, %s283
      %p287 = scmp.eq.s32.totalorder %s37, 0
      %p288 = por %p286, %p287
      %p289 = scmp.ne.s32.totalorder %s281, %s283
      %p290 = scmp.eq.s32.totalorder %s42, 1
      %p291 = por %p289, %p290
      %p292 = scmp.ne.s32.totalorder %s283, %s284
      %p293 = scmp.eq.s32.totalorder %s42, 0
      %p294 = por %p292, %p293
      %p295 = scmp.ne.s32.totalorder %s283, %s284
      %p296 = scmp.eq.s32.totalorder %s43, 1
      %p297 = por %p295, %p296
      %p299 = scmp.ne.s32.totalorder %s284, %s298
      %p300 = scmp.eq.s32.totalorder %s43, 0
      %p301 = por %p299, %p300
      %s303 = sadd.s32 %s302, 1
      %p306 = scmp.eq.s32.totalorder %s37, 1
      %p307 = scmp.ne.s32.totalorder %s302, %s304
      %p308 = scmp.eq.s32.totalorder %s37, 0
      %p309 = por %p307, %p308
      %p310 = scmp.ne.s32.totalorder %s302, %s304
      %p311 = scmp.eq.s32.totalorder %s42, 1
      %p312 = por %p310, %p311
      %p313 = scmp.ne.s32.totalorder %s304, %s305
      %p314 = scmp.eq.s32.totalorder %s42, 0
      %p315 = por %p313, %p314
      %p316 = scmp.ne.s32.totalorder %s304, %s305
      %p317 = scmp.eq.s32.totalorder %s43, 1
      %p318 = por %p316, %p317
      %p320 = scmp.ne.s32.totalorder %s305, %s319
      %p321 = scmp.eq.s32.totalorder %s43, 0
      %p322 = por %p320, %p321
      %s324 = sadd.s32 %s323, 1
      %p327 = scmp.eq.s32.totalorder %s37, 1
      %p328 = scmp.ne.s32.totalorder %s323, %s325
      %p329 = scmp.eq.s32.totalorder %s37, 0
      %p330 = por %p328, %p329
      %p331 = scmp.ne.s32.totalorder %s323, %s325
      %p332 = scmp.eq.s32.totalorder %s42, 1
      %p333 = por %p331, %p332
      %p334 = scmp.ne.s32.totalorder %s325, %s326
      %p335 = scmp.eq.s32.totalorder %s42, 0
      %p336 = por %p334, %p335
      %p337 = scmp.ne.s32.totalorder %s325, %s326
      %p338 = scmp.eq.s32.totalorder %s43, 1
      %p339 = por %p337, %p338
      %p341 = scmp.ne.s32.totalorder %s326, %s340
      %p342 = scmp.eq.s32.totalorder %s43, 0
      %p343 = por %p341, %p342
      %s345 = sadd.s32 %s344, 1
      %p348 = scmp.eq.s32.totalorder %s37, 1
      %p349 = scmp.ne.s32.totalorder %s344, %s346
      %p350 = scmp.eq.s32.totalorder %s37, 0
      %p351 = por %p349, %p350
      %p352 = scmp.ne.s32.totalorder %s344, %s346
      %p353 = scmp.eq.s32.totalorder %s42, 1
      %p354 = por %p352, %p353
      %p355 = scmp.ne.s32.totalorder %s346, %s347
      %p356 = scmp.eq.s32.totalorder %s42, 0
      %p357 = por %p355, %p356
      %p358 = scmp.ne.s32.totalorder %s346, %s347
      %p359 = scmp.eq.s32.totalorder %s43, 1
      %p360 = por %p358, %p359
      %p362 = scmp.ne.s32.totalorder %s347, %s361
      %p363 = scmp.eq.s32.totalorder %s43, 0
      %p364 = por %p362, %p363
      %s366 = sadd.s32 %s365, 1
      %p369 = scmp.eq.s32.totalorder %s37, 1
      %p370 = scmp.ne.s32.totalorder %s365, %s367
      %p371 = scmp.eq.s32.totalorder %s37, 0
      %p372 = por %p370, %p371
      %p373 = scmp.ne.s32.totalorder %s365, %s367
      %p374 = scmp.eq.s32.totalorder %s42, 1
      %p375 = por %p373, %p374
      %p376 = scmp.ne.s32.totalorder %s367, %s368
      %p377 = scmp.eq.s32.totalorder %s42, 0
      %p378 = por %p376, %p377
      %p379 = scmp.ne.s32.totalorder %s367, %s368
      %p380 = scmp.eq.s32.totalorder %s43, 1
      %p381 = por %p379, %p380
      %p383 = scmp.ne.s32.totalorder %s368, %s382
      %p384 = scmp.eq.s32.totalorder %s43, 0
      %p385 = por %p383, %p384
      %s386 = ssub.s32 %s37, %s44
      %p387 = scmp.eq.s32.totalorder %s386, 0
      %s389 = sadd.s32 %s388, 1
      %s390 = scalar_select %p387, %s388, %s389
      %p393 = pneg %p387
      %p394 = scmp.eq.s32.totalorder %s37, 1
      %p395 = por %p393, %p394
      %p396 = scmp.ne.s32.totalorder %s388, %s391
      %p397 = scmp.eq.s32.totalorder %s37, 0
      %p398 = por %p396, %p397
      %p399 = scmp.ne.s32.totalorder %s388, %s391
      %p400 = scmp.eq.s32.totalorder %s42, 1
      %p401 = por %p399, %p400
      %p402 = scmp.ne.s32.totalorder %s391, %s392
      %p403 = scmp.eq.s32.totalorder %s42, 0
      %p404 = por %p402, %p403
      %p405 = scmp.ne.s32.totalorder %s391, %s392
      %p406 = scmp.eq.s32.totalorder %s43, 1
      %p407 = por %p405, %p406
      %p409 = scmp.ne.s32.totalorder %s392, %s408
      %p410 = scmp.eq.s32.totalorder %s43, 0
      %p411 = por %p409, %p410
      %s412 = ssub.s32 %s37, %s44
      %p413 = scmp.eq.s32.totalorder %s412, 0
      %s415 = sadd.s32 %s414, 1
      %s416 = scalar_select %p413, %s414, %s415
      %p419 = pneg %p413
      %p420 = scmp.eq.s32.totalorder %s37, 1
      %p421 = por %p419, %p420
      %p422 = scmp.ne.s32.totalorder %s414, %s417
      %p423 = scmp.eq.s32.totalorder %s37, 0
      %p424 = por %p422, %p423
      %p425 = scmp.ne.s32.totalorder %s414, %s417
      %p426 = scmp.eq.s32.totalorder %s42, 1
      %p427 = por %p425, %p426
      %p428 = scmp.ne.s32.totalorder %s417, %s418
      %p429 = scmp.eq.s32.totalorder %s42, 0
      %p430 = por %p428, %p429
      %p431 = scmp.ne.s32.totalorder %s417, %s418
      %p432 = scmp.eq.s32.totalorder %s43, 1
      %p433 = por %p431, %p432
      %p435 = scmp.ne.s32.totalorder %s418, %s434
      %p436 = scmp.eq.s32.totalorder %s43, 0
      %p437 = por %p435, %p436
      %s438 = ssub.s32 %s37, %s44
      %p439 = scmp.eq.s32.totalorder %s438, 0
      %s441 = sadd.s32 %s440, 1
      %s442 = scalar_select %p439, %s440, %s441
      %p445 = pneg %p439
      %p446 = scmp.eq.s32.totalorder %s37, 1
      %p447 = por %p445, %p446
      %p448 = scmp.ne.s32.totalorder %s440, %s443
      %p449 = scmp.eq.s32.totalorder %s37, 0
      %p450 = por %p448, %p449
      %p451 = scmp.ne.s32.totalorder %s440, %s443
      %p452 = scmp.eq.s32.totalorder %s42, 1
      %p453 = por %p451, %p452
      %p454 = scmp.ne.s32.totalorder %s443, %s444
      %p455 = scmp.eq.s32.totalorder %s42, 0
      %p456 = por %p454, %p455
      %p457 = scmp.ne.s32.totalorder %s443, %s444
      %p458 = scmp.eq.s32.totalorder %s43, 1
      %p459 = por %p457, %p458
      %p461 = scmp.ne.s32.totalorder %s444, %s460
      %p462 = scmp.eq.s32.totalorder %s43, 0
      %p463 = por %p461, %p462
      %s464 = ssub.s32 %s37, %s44
      %p465 = scmp.eq.s32.totalorder %s464, 0
      %s467 = sadd.s32 %s466, 1
      %s468 = scalar_select %p465, %s466, %s467
      %p471 = pneg %p465
      %p472 = scmp.eq.s32.totalorder %s37, 1
      %p473 = por %p471, %p472
      %p474 = scmp.ne.s32.totalorder %s466, %s469
      %p475 = scmp.eq.s32.totalorder %s37, 0
      %p476 = por %p474, %p475
      %p477 = scmp.ne.s32.totalorder %s466, %s469
      %p478 = scmp.eq.s32.totalorder %s42, 1
      %p479 = por %p477, %p478
      %p480 = scmp.ne.s32.totalorder %s469, %s470
      %p481 = scmp.eq.s32.totalorder %s42, 0
      %p482 = por %p480, %p481
      %p483 = scmp.ne.s32.totalorder %s469, %s470
      %p484 = scmp.eq.s32.totalorder %s43, 1
      %p485 = por %p483, %p484
      %p487 = scmp.ne.s32.totalorder %s470, %s486
      %p488 = scmp.eq.s32.totalorder %s43, 0
      %p489 = por %p487, %p488
      %s490 = ssub.s32 %s37, %s44
      %p491 = scmp.eq.s32.totalorder %s490, 0
      %s493 = sadd.s32 %s492, 1
      %s494 = scalar_select %p491, %s492, %s493
      %p497 = pneg %p491
      %p498 = scmp.eq.s32.totalorder %s37, 1
      %p499 = por %p497, %p498
      %p500 = scmp.ne.s32.totalorder %s492, %s495
      %p501 = scmp.eq.s32.totalorder %s37, 0
      %p502 = por %p500, %p501
      %p503 = scmp.ne.s32.totalorder %s492, %s495
      %p504 = scmp.eq.s32.totalorder %s42, 1
      %p505 = por %p503, %p504
      %p506 = scmp.ne.s32.totalorder %s495, %s496
      %p507 = scmp.eq.s32.totalorder %s42, 0
      %p508 = por %p506, %p507
      %p509 = scmp.ne.s32.totalorder %s495, %s496
      %p510 = scmp.eq.s32.totalorder %s43, 1
      %p511 = por %p509, %p510
      %p513 = scmp.ne.s32.totalorder %s496, %s512
      %p514 = scmp.eq.s32.totalorder %s43, 0
      %p515 = por %p513, %p514
      %s516 = ssub.s32 %s37, %s44
      %p517 = scmp.eq.s32.totalorder %s516, 0
      %s519 = sadd.s32 %s518, 1
      %s520 = scalar_select %p517, %s518, %s519
      %p523 = pneg %p517
      %p524 = scmp.eq.s32.totalorder %s37, 1
      %p525 = por %p523, %p524
      %p526 = scmp.ne.s32.totalorder %s518, %s521
      %p527 = scmp.eq.s32.totalorder %s37, 0
      %p528 = por %p526, %p527
      %p529 = scmp.ne.s32.totalorder %s518, %s521
      %p530 = scmp.eq.s32.totalorder %s42, 1
      %p531 = por %p529, %p530
      %p532 = scmp.ne.s32.totalorder %s521, %s522
      %p533 = scmp.eq.s32.totalorder %s42, 0
      %p534 = por %p532, %p533
      %p535 = scmp.ne.s32.totalorder %s521, %s522
      %p536 = scmp.eq.s32.totalorder %s43, 1
      %p537 = por %p535, %p536
      %p539 = scmp.ne.s32.totalorder %s522, %s538
      %p540 = scmp.eq.s32.totalorder %s43, 0
      %p541 = por %p539, %p540
      %s542 = ssub.s32 %s37, %s44
      %p543 = scmp.eq.s32.totalorder %s542, 0
      %s545 = sadd.s32 %s544, 1
      %s546 = scalar_select %p543, %s544, %s545
      %p549 = pneg %p543
      %p550 = scmp.eq.s32.totalorder %s37, 1
      %p551 = por %p549, %p550
      %p552 = scmp.ne.s32.totalorder %s544, %s547
      %p553 = scmp.eq.s32.totalorder %s37, 0
      %p554 = por %p552, %p553
      %p555 = scmp.ne.s32.totalorder %s544, %s547
      %p556 = scmp.eq.s32.totalorder %s42, 1
      %p557 = por %p555, %p556
      %p558 = scmp.ne.s32.totalorder %s547, %s548
      %p559 = scmp.eq.s32.totalorder %s42, 0
      %p560 = por %p558, %p559
      %p561 = scmp.ne.s32.totalorder %s547, %s548
      %p562 = scmp.eq.s32.totalorder %s43, 1
      %p563 = por %p561, %p562
      %p565 = scmp.ne.s32.totalorder %s548, %s564
      %p566 = scmp.eq.s32.totalorder %s43, 0
      %p567 = por %p565, %p566
      %p568 = scmp.le.s32.totalorder 1, %s37
      %p569 = scmp.lt.s32.totalorder %s37, 3
      %p570 = pnand %p568, %p569
      %p571 = pneg %p570
      // Predicated region
      $region9: #{body.3} parent=5 // pred_check
        _
      $region10: #{body.3} parent=5 // pred_check_branch
        %573 = sbr.rel (%p570) target = $region12
      $region11: #{body.3} parent=5 // pred_region
        %s574 = ssub.s32 %s37, 1
        // Predicated region
        $region13: #{body.3} parent=11 // pred_check
          %p575 = pneg %p84
        $region14: #{body.3} parent=11 // pred_check_branch
          %577 = sbr.rel (%p575) target = $region16
        $region15: #{body.3} parent=11 // pred_region
          _
        $region16: #{body.3} parent=11 // pred_fallthru
          _
        // Predicated region
        $region17: #{body.3} parent=11 // pred_check
          %p578 = pneg %p105
        $region18: #{body.3} parent=11 // pred_check_branch
          %580 = sbr.rel (%p578) target = $region20
        $region19: #{body.3} parent=11 // pred_region
          _
        $region20: #{body.3} parent=11 // pred_fallthru
          _
        // Predicated region
        $region21: #{body.3} parent=11 // pred_check
          %p581 = pneg %p126
        $region22: #{body.3} parent=11 // pred_check_branch
          %583 = sbr.rel (%p581) target = $region24
        $region23: #{body.3} parent=11 // pred_region
          _
        $region24: #{body.3} parent=11 // pred_fallthru
          _
        // Predicated region
        $region25: #{body.3} parent=11 // pred_check
          %p584 = pneg %p147
        $region26: #{body.3} parent=11 // pred_check_branch
          %586 = sbr.rel (%p584) target = $region28
        $region27: #{body.3} parent=11 // pred_region
          _
        $region28: #{body.3} parent=11 // pred_fallthru
          _
        // Predicated region
        $region29: #{body.3} parent=11 // pred_check
          %p587 = pneg %p168
        $region30: #{body.3} parent=11 // pred_check_branch
          %589 = sbr.rel (%p587) target = $region32
        $region31: #{body.3} parent=11 // pred_region
          _
        $region32: #{body.3} parent=11 // pred_fallthru
          _
        // Predicated region
        $region33: #{body.3} parent=11 // pred_check
          %p590 = pneg %p189
        $region34: #{body.3} parent=11 // pred_check_branch
          %592 = sbr.rel (%p590) target = $region36
        $region35: #{body.3} parent=11 // pred_region
          _
        $region36: #{body.3} parent=11 // pred_fallthru
          _
        // Predicated region
        $region37: #{body.3} parent=11 // pred_check
          %p593 = pneg %p210
        $region38: #{body.3} parent=11 // pred_check_branch
          %595 = sbr.rel (%p593) target = $region40
        $region39: #{body.3} parent=11 // pred_region
          _
        $region40: #{body.3} parent=11 // pred_fallthru
          _
        // Predicated region
        $region41: #{body.3} parent=11 // pred_check
          %p596 = pneg %p231
        $region42: #{body.3} parent=11 // pred_check_branch
          %598 = sbr.rel (%p596) target = $region44
        $region43: #{body.3} parent=11 // pred_region
          _
        $region44: #{body.3} parent=11 // pred_fallthru
          _
        // Predicated region
        $region45: #{body.3} parent=11 // pred_check
          %p599 = pneg %p252
        $region46: #{body.3} parent=11 // pred_check_branch
          %601 = sbr.rel (%p599) target = $region48
        $region47: #{body.3} parent=11 // pred_region
          _
        $region48: #{body.3} parent=11 // pred_fallthru
          _
        // Predicated region
        $region49: #{body.3} parent=11 // pred_check
          %p602 = pneg %p273
        $region50: #{body.3} parent=11 // pred_check_branch
          %604 = sbr.rel (%p602) target = $region52
        $region51: #{body.3} parent=11 // pred_region
          _
        $region52: #{body.3} parent=11 // pred_fallthru
          _
        // Predicated region
        $region53: #{body.3} parent=11 // pred_check
          %p605 = pneg %p294
        $region54: #{body.3} parent=11 // pred_check_branch
          %607 = sbr.rel (%p605) target = $region56
        $region55: #{body.3} parent=11 // pred_region
          _
        $region56: #{body.3} parent=11 // pred_fallthru
          _
        // Predicated region
        $region57: #{body.3} parent=11 // pred_check
          %p608 = pneg %p315
        $region58: #{body.3} parent=11 // pred_check_branch
          %610 = sbr.rel (%p608) target = $region60
        $region59: #{body.3} parent=11 // pred_region
          _
        $region60: #{body.3} parent=11 // pred_fallthru
          _
        // Predicated region
        $region61: #{body.3} parent=11 // pred_check
          %p611 = pneg %p336
        $region62: #{body.3} parent=11 // pred_check_branch
          %613 = sbr.rel (%p611) target = $region64
        $region63: #{body.3} parent=11 // pred_region
          _
        $region64: #{body.3} parent=11 // pred_fallthru
          _
        // Predicated region
        $region65: #{body.3} parent=11 // pred_check
          %p614 = pneg %p357
        $region66: #{body.3} parent=11 // pred_check_branch
          %616 = sbr.rel (%p614) target = $region68
        $region67: #{body.3} parent=11 // pred_region
          _
        $region68: #{body.3} parent=11 // pred_fallthru
          _
        // Predicated region
        $region69: #{body.3} parent=11 // pred_check
          %p617 = pneg %p378
        $region70: #{body.3} parent=11 // pred_check_branch
          %619 = sbr.rel (%p617) target = $region72
        $region71: #{body.3} parent=11 // pred_region
          _
        $region72: #{body.3} parent=11 // pred_fallthru
          _
      $region12: #{body.3} parent=5 // pred_fallthru
        _
      %p620 = scmp.lt.s32.totalorder %s37, 2
      // Predicated region
      $region73: #{body.3} parent=5 // pred_check
        %p621 = pneg %p620
      $region74: #{body.3} parent=5 // pred_check_branch
        %623 = sbr.rel (%p621) target = $region76
      $region75: #{body.3} parent=5 // pred_region
        // Predicated region
        $region77: #{body.3} parent=75 // pred_check
          %p624 = pneg %p57
        $region78: #{body.3} parent=75 // pred_check_branch
          %626 = sbr.rel (%p624) target = $region80
        $region79: #{body.3} parent=75 // pred_region
          %p627 = scmp.lt.s32.totalorder %s37, 1
          %s628 = scalar_select %p627, %s37, 1
          %s629 = smul.addr %s628, 8
          %s630 = scalar_lea.vmem %s0, %s629
        $region80: #{body.3} parent=75 // pred_fallthru
          _
        // Predicated region
        $region81: #{body.3} parent=75 // pred_check
          %p631 = pneg %p398
        $region82: #{body.3} parent=75 // pred_check_branch
          %633 = sbr.rel (%p631) target = $region84
        $region83: #{body.3} parent=75 // pred_region
          %p634 = scmp.lt.s32.totalorder %s37, 1
          %s635 = scalar_select %p634, %s37, 1
          %s636 = smul.addr %s635, 8
          %s637 = scalar_lea.vmem %s16, %s636
        $region84: #{body.3} parent=75 // pred_fallthru
          _
        // Predicated region
        $region85: #{body.3} parent=75 // pred_check
          %p638 = pneg %p424
        $region86: #{body.3} parent=75 // pred_check_branch
          %640 = sbr.rel (%p638) target = $region88
        $region87: #{body.3} parent=75 // pred_region
          %p641 = scmp.lt.s32.totalorder %s37, 1
          %s642 = scalar_select %p641, %s37, 1
          %s643 = smul.addr %s642, 8
          %s644 = scalar_lea.vmem %s17, %s643
        $region88: #{body.3} parent=75 // pred_fallthru
          _
        // Predicated region
        $region89: #{body.3} parent=75 // pred_check
          %p645 = pneg %p450
        $region90: #{body.3} parent=75 // pred_check_branch
          %647 = sbr.rel (%p645) target = $region92
        $region91: #{body.3} parent=75 // pred_region
          %s648 = sand.u32 %s440, 1
          %s649 = scalar_lea.sflag [#allocation5], %s648
          %s650 = sand.u32 %s440, 1
          %s651 = smul.addr %s650, 8
          %s652 = scalar_lea.vmem [#allocation4], %s651
          %654 = vsyncadd %s649, 0
          %s655 = smul.addr %s37, 8
          %s656 = scalar_lea.hbm %s18, %s655
          %s658 = sshll.u32 %s656, 4
          %s659 = int_to_ptr.hbm [resolvable:$true] %s658
          %s660 = sshll.u32 %s652, 4
          %s661 = int_to_ptr.vmem [resolvable:$true] %s660
          %663 = dma.hbm_to_vmem [thread:$0]  %s659, 128, %s661, %s649
        $region92: #{body.3} parent=75 // pred_fallthru
          _
      $region76: #{body.3} parent=5 // pred_fallthru
        _
      %p664 = scmp.le.s32.totalorder 1, %s37
      %p665 = scmp.lt.s32.totalorder %s37, 3
      %p666 = pnand %p664, %p665
      %p667 = pneg %p666
      // Predicated region
      $region93: #{body.3} parent=5 // pred_check
        _
      $region94: #{body.3} parent=5 // pred_check_branch
        %669 = sbr.rel (%p666) target = $region96
      $region95: #{body.3} parent=5 // pred_region
        %s670 = ssub.s32 %s37, 1
        %s671 = sand.u32 %s443, 1
        %s672 = scalar_lea.sflag [#allocation5], %s671
        %s673 = sand.u32 %s443, 1
        %s674 = smul.addr %s673, 8
        %s675 = scalar_lea.vmem [#allocation4], %s674
        // Predicated region
        $region97: #{body.3} parent=95 // pred_check
          %p676 = pneg %p456
        $region98: #{body.3} parent=95 // pred_check_branch
          %678 = sbr.rel (%p676) target = $region100
        $region99: #{body.3} parent=95 // pred_region
          %680 = dma.done %s672, 128
        $region100: #{body.3} parent=95 // pred_fallthru
          _
        %p681 = scmp.lt.s32.totalorder %s42, 1
        %s682 = scalar_select %p681, %s42, 1
        %s683 = smul.addr %s682, 8
        %s684 = scalar_lea.vmem %s0, %s683
        %p685 = pneg %p63
        %p686 = pneg %p60
        %p687 = pneg %p84
        %p688 = pneg %p81
        %p689 = pneg %p105
        %p690 = pneg %p102
        %p691 = pneg %p126
        %p692 = pneg %p123
        %p693 = pneg %p147
        %p694 = pneg %p144
        %p695 = pneg %p168
        %p696 = pneg %p165
        %p697 = pneg %p189
        %p698 = pneg %p186
        %p699 = pneg %p210
        %p700 = pneg %p207
        %p701 = pneg %p231
        %p702 = pneg %p228
        %p703 = pneg %p252
        %p704 = pneg %p249
        %p705 = pneg %p273
        %p706 = pneg %p270
        %p707 = pneg %p294
        %p708 = pneg %p291
        %p709 = pneg %p315
        %p710 = pneg %p312
        %p711 = pneg %p336
        %p712 = pneg %p333
        %p713 = pneg %p357
        %p714 = pneg %p354
        %p715 = pneg %p378
        %p716 = pneg %p375
        %p717 = scmp.lt.s32.totalorder %s42, 1
        %s718 = scalar_select %p717, %s42, 1
        %s719 = smul.addr %s718, 8
        %s720 = scalar_lea.vmem %s16, %s719
        %p721 = pneg %p404
        %p722 = pneg %p401
        %p723 = scmp.lt.s32.totalorder %s42, 1
        %s724 = scalar_select %p723, %s42, 1
        %s725 = smul.addr %s724, 8
        %s726 = scalar_lea.vmem %s17, %s725
        %p727 = pneg %p430
        %p728 = pneg %p427
        %s729 = sand.u32 %s443, 1
        %s730 = scalar_lea.sflag [#allocation5], %s729
        %s731 = sand.u32 %s443, 1
        %s732 = smul.addr %s731, 8
        %s733 = scalar_lea.vmem [#allocation4], %s732
        %p734 = pneg %p456
        %p735 = pneg %p453
        %p736 = pneg %p482
        %p737 = pneg %p479
        %p738 = scmp.lt.s32.totalorder %s42, 1
        %s739 = scalar_select %p738, %s42, 1
        %s740 = smul.addr %s739, 8
        %s741 = scalar_lea.vmem %s19, %s740
        %p742 = pneg %p508
        %p743 = pneg %p505
        %p744 = scmp.lt.s32.totalorder %s42, 1
        %s745 = scalar_select %p744, %s42, 1
        %s746 = smul.addr %s745, 8
        %s747 = scalar_lea.vmem %s20, %s746
        %p748 = pneg %p534
        %p749 = pneg %p531
        %p750 = scmp.lt.s32.totalorder %s42, 1
        %s751 = scalar_select %p750, %s42, 1
        %s752 = smul.addr %s751, 8
        %s753 = scalar_lea.vmem %s21, %s752
        %p754 = pneg %p560
        %p755 = pneg %p557
        %s756 = sand.u32 %s547, 1
        %s757 = scalar_lea.sflag [#allocation6], %s756
        %s758 = sand.u32 %s547, 1
        %s759 = smul.addr %s758, 8
        %s760 = scalar_lea.vmem [#allocation7], %s759
        %p761 = scmp.lt.s32.totalorder %s42, 1
        %s762 = scalar_select %p761, %s42, 1
        %s763 = smul.addr %s762, 8
        %s764 = scalar_lea.vmem %s0, %s763
        %p765 = scmp.lt.s32.totalorder %s42, 1
        %s766 = scalar_select %p765, %s42, 1
        %s767 = smul.addr %s766, 8
        %s768 = scalar_lea.vmem %s16, %s767
        %p769 = scmp.lt.s32.totalorder %s42, 1
        %s770 = scalar_select %p769, %s42, 1
        %s771 = smul.addr %s770, 8
        %s772 = scalar_lea.vmem %s17, %s771
        %p773 = scmp.lt.s32.totalorder %s42, 1
        %s774 = scalar_select %p773, %s42, 1
        %s775 = smul.addr %s774, 8
        %s776 = scalar_lea.vmem %s19, %s775
        %p777 = scmp.lt.s32.totalorder %s42, 1
        %s778 = scalar_select %p777, %s42, 1
        %s779 = smul.addr %s778, 8
        %s780 = scalar_lea.vmem %s20, %s779
        %p781 = scmp.lt.s32.totalorder %s42, 1
        %s782 = scalar_select %p781, %s42, 1
        %s783 = smul.addr %s782, 8
        %s784 = scalar_lea.vmem %s21, %s783
        %v786 = vld [vmem:[%s764] sm:$0xff]
        %v787 = vld [vmem:[%s1] sm:$0xff]
        %v788 = vadd.f32 %v786, %v787
        %vm789 = vcmask 261120
        %v790 = vsel %vm789, %v788, 0.0
        %791 = vadd.xlane.f32.xlu0 %v790
        %v792 = vpop.xlane.xlu0 %791
        %v793 = vrcp.pop 32.0
        %v794 = vmul.f32 32.0, %v793
        %v795 = vsub.f32 1.0, %v794
        %v796 = vmul.f32 %v793, %v795
        %v797 = vadd.f32 %v793, %v796
        %vm798 = vweird.f32 %v793
        %v799 = vsel %vm798, %v793, %v797
        %v800 = vmul.f32 %v792, %v799
        %v801 = vsub.f32 %v788, %v800
        %v802 = vmul.f32 %v801, %v801
        %v803 = vsel %vm789, %v802, 0.0
        %804 = vadd.xlane.f32.xlu0 %v803
        %v805 = vpop.xlane.xlu0 %804
        %v806 = vmul.f32 %v805, %v799
        %v807 = vadd.f32 %v806, 1e-06
        %v808 = vrsqrt.pop %v807
        %v809 = vmul.f32 %v808, %v807
        %v810 = vmul.f32 %v809, %v808
        %v811 = vmul.f32 0.5, %v810
        %v812 = vsub.f32 1.5, %v811
        %v813 = vmul.f32 %v808, %v812
        %vm814 = vweird.f32 %v807
        %vm815 = vweird.f32 %v808
        %vm816 = vmor %vm814, %vm815
        %v817 = vsel %vm816, %v808, %v813
        %v818 = vmul.f32 %v801, %v817
        %v819 = vld [vmem:[%s2] sm:$0x1]
        %v821 = vperm.slane %v819, 0
        %v823 = vmul.f32 %v818, %v821
        %v824 = vld [vmem:[%s3] sm:$0x1]
        %v826 = vperm.slane %v824, 0
        %v828 = vadd.f32 %v823, %v826
        %v829 = vpack.c.bf16 %v828, %v828
        %v830 = vld [vmem:[%s4] sm:$0xf]
        %v831 = vld [vmem:[%s4 + $0x4] sm:$0xf]
        %v832 = vld [vmem:[%s4 + $0x8] sm:$0xf]
        %v833 = vld [vmem:[%s4 + $0xc] sm:$0xf]
        %v834 = vld [vmem:[%s5] sm:$0x1]
        %v836 = vperm.slane %v834, 0
        %v842 = vunpack.c.l.b16 %v830
        %v843 = vunpack.c.l.b16 %v831
        %v844 = vunpack.c.l.b16 %v832
        %v845 = vunpack.c.l.b16 %v833
        %v846 = vpack.c.b16 %v843, %v842
        %v847 = vpack.c.b16 %v845, %v844
        %v851 = vsel %vm789, %v829, 0
        %853 = vmatpush.bf16.msra.mxu0 0
        %854 = vmatpush.bf16.msra.mxu0 0
        %855 = vmatpush.bf16.msra.mxu0 0
        %856 = vmatpush.bf16.msra.mxu0 0
        %857 = vmatpush.bf16.msra.mxu0 0
        %858 = vmatpush.bf16.msra.mxu0 0
        %859 = vmatpush.bf16.msra.mxu0 %v847
        %860 = vmatpush.bf16.msra.mxu0 %v846
        %861 = vmatmul.bf16.gmra.mxu0 %v851
        %v862 = vpop.f32.mrf.mxu0
        %v863 = vadd.f32 %v836, %v862
        %v864 = vpop.f32.mrf.mxu0
        %865 = vdwg.mxu0
        %v866 = vpack.c.bf16 %v863, %v863
        %868 = vrot.lane.b32.xlu0 %v866, 96
        %v869 = vpop.permute.xlu0 %868
        %vm870 = vcmask 64512
        %v872 = vsel %vm870, %v866, 0
        %v875 = vsel %vm870, %v869, 0
        %877 = vmatpush.bf16.xpose.msra.mxu0 0
        %878 = vmatpush.bf16.xpose.msra.mxu0 0
        %879 = vmatpush.bf16.xpose.msra.mxu0 0
        %880 = vmatpush.bf16.xpose.msra.mxu0 0
        %881 = vmatpush.bf16.xpose.msra.mxu0 0
        %882 = vmatpush.bf16.xpose.msra.mxu0 0
        %883 = vmatpush.bf16.xpose.msra.mxu0 0
        %884 = vmatpush.bf16.xpose.msra.mxu0 %v875
        %885 = vmatmul.bf16.gmra.mxu0 %v872
        %v886 = vpop.f32.mrf.mxu0
        %v887 = vadd.f32 0.0, %v886
        %v888 = vpop.f32.mrf.mxu0
        %889 = vdwg.mxu0
        %v890 = vmul.f32 %v887, 0.35355338
        %v891 = vsel %vm870, %v890, -inf
        %892 = vmax.xlane.f32.xlu0 %v891
        %v893 = vpop.xlane.xlu0 %892
        %v894 = vsub.f32 %v890, %v893
        %v895 = vmul.f32 %v894, 1.442695
        %v896 = vpow.pop %v895
        %v897 = vsel %vm870, %v896, 0.0
        %898 = vadd.xlane.f32.xlu0 %v897
        %v899 = vpop.xlane.xlu0 %898
        %v900 = vrcp.pop %v899
        %v901 = vmul.f32 %v896, %v900
        %v902 = vpack.c.bf16 %v901, %v901
        %903 = vrot.lane.b32.xlu0 %v866, 64
        %v904 = vpop.permute.xlu0 %903
        %v906 = vsel %vm870, %v902, 0
        %vm908 = vcmask 1043456
        %v910 = vsel %vm908, %v904, 0
        %912 = vmatpush.bf16.msra.mxu0 0
        %913 = vmatpush.bf16.msra.mxu0 0
        %914 = vmatpush.bf16.msra.mxu0 0
        %915 = vmatpush.bf16.msra.mxu0 0
        %916 = vmatpush.bf16.msra.mxu0 0
        %917 = vmatpush.bf16.msra.mxu0 0
        %918 = vmatpush.bf16.msra.mxu0 0
        %919 = vmatpush.bf16.msra.mxu0 %v910
        %920 = vmatmul.bf16.gmra.mxu0 %v906
        %v921 = vpop.f32.mrf.mxu0
        %v922 = vadd.f32 0.0, %v921
        %v923 = vpop.f32.mrf.mxu0
        %924 = vdwg.mxu0
        %925 = vst.msk [vmem:[#allocation2] sm:$0xff] %vm870, %v922
        %926 = vrot.lane.b32.xlu0 %v866, 120
        %v927 = vpop.permute.xlu0 %926
        %928 = vrot.lane.b32.xlu0 %v866, 88
        %v929 = vpop.permute.xlu0 %928
        %v931 = vsel %vm870, %v927, 0
        %v934 = vsel %vm870, %v929, 0
        %936 = vmatpush.bf16.xpose.msra.mxu0 0
        %937 = vmatpush.bf16.xpose.msra.mxu0 0
        %938 = vmatpush.bf16.xpose.msra.mxu0 0
        %939 = vmatpush.bf16.xpose.msra.mxu0 0
        %940 = vmatpush.bf16.xpose.msra.mxu0 0
        %941 = vmatpush.bf16.xpose.msra.mxu0 0
        %942 = vmatpush.bf16.xpose.msra.mxu0 0
        %943 = vmatpush.bf16.xpose.msra.mxu0 %v934
        %944 = vmatmul.bf16.gmra.mxu0 %v931
        %v945 = vpop.f32.mrf.mxu0
        %v946 = vadd.f32 0.0, %v945
        %v947 = vpop.f32.mrf.mxu0
        %948 = vdwg.mxu0
        %v949 = vmul.f32 %v946, 0.35355338
        %v950 = vsel %vm870, %v949, -inf
        %951 = vmax.xlane.f32.xlu0 %v950
        %v952 = vpop.xlane.xlu0 %951
        %v953 = vsub.f32 %v949, %v952
        %v954 = vmul.f32 %v953, 1.442695
        %v955 = vpow.pop %v954
        %v956 = vsel %vm870, %v955, 0.0
        %957 = vadd.xlane.f32.xlu0 %v956
        %v958 = vpop.xlane.xlu0 %957
        %v959 = vrcp.pop %v958
        %v960 = vmul.f32 %v955, %v959
        %v961 = vpack.c.bf16 %v960, %v960
        %962 = vrot.lane.b32.xlu0 %v866, 56
        %v963 = vpop.permute.xlu0 %962
        %v965 = vsel %vm870, %v961, 0
        %v968 = vsel %vm908, %v963, 0
        %970 = vmatpush.bf16.msra.mxu0 0
        %971 = vmatpush.bf16.msra.mxu0 0
        %972 = vmatpush.bf16.msra.mxu0 0
        %973 = vmatpush.bf16.msra.mxu0 0
        %974 = vmatpush.bf16.msra.mxu0 0
        %975 = vmatpush.bf16.msra.mxu0 0
        %976 = vmatpush.bf16.msra.mxu0 0
        %977 = vmatpush.bf16.msra.mxu0 %v968
        %978 = vmatmul.bf16.gmra.mxu0 %v965
        %v979 = vpop.f32.mrf.mxu0
        %v980 = vadd.f32 0.0, %v979
        %v981 = vpop.f32.mrf.mxu0
        %982 = vdwg.mxu0
        %984 = vrot.lane.b32.xlu0 %v980, 8
        %v985 = vpop.permute.xlu0 %984
        %vm987 = vcmask 130112
        %988 = vst.msk [vmem:[#allocation2] sm:$0xff] %vm987, %v985
        %989 = vrot.lane.b32.xlu0 %v866, 112
        %v990 = vpop.permute.xlu0 %989
        %991 = vrot.lane.b32.xlu0 %v866, 80
        %v992 = vpop.permute.xlu0 %991
        %v994 = vsel %vm870, %v990, 0
        %v997 = vsel %vm870, %v992, 0
        %999 = vmatpush.bf16.xpose.msra.mxu0 0
        %1000 = vmatpush.bf16.xpose.msra.mxu0 0
        %1001 = vmatpush.bf16.xpose.msra.mxu0 0
        %1002 = vmatpush.bf16.xpose.msra.mxu0 0
        %1003 = vmatpush.bf16.xpose.msra.mxu0 0
        %1004 = vmatpush.bf16.xpose.msra.mxu0 0
        %1005 = vmatpush.bf16.xpose.msra.mxu0 0
        %1006 = vmatpush.bf16.xpose.msra.mxu0 %v997
        %1007 = vmatmul.bf16.gmra.mxu0 %v994
        %v1008 = vpop.f32.mrf.mxu0
        %v1009 = vadd.f32 0.0, %v1008
        %v1010 = vpop.f32.mrf.mxu0
        %1011 = vdwg.mxu0
        %v1012 = vmul.f32 %v1009, 0.35355338
        %v1013 = vsel %vm870, %v1012, -inf
        %1014 = vmax.xlane.f32.xlu0 %v1013
        %v1015 = vpop.xlane.xlu0 %1014
        %v1016 = vsub.f32 %v1012, %v1015
        %v1017 = vmul.f32 %v1016, 1.442695
        %v1018 = vpow.pop %v1017
        %v1019 = vsel %vm870, %v1018, 0.0
        %1020 = vadd.xlane.f32.xlu0 %v1019
        %v1021 = vpop.xlane.xlu0 %1020
        %v1022 = vrcp.pop %v1021
        %v1023 = vmul.f32 %v1018, %v1022
        %v1024 = vpack.c.bf16 %v1023, %v1023
        %1025 = vrot.lane.b32.xlu0 %v866, 48
        %v1026 = vpop.permute.xlu0 %1025
        %v1028 = vsel %vm870, %v1024, 0
        %v1031 = vsel %vm908, %v1026, 0
        %1033 = vmatpush.bf16.msra.mxu0 0
        %1034 = vmatpush.bf16.msra.mxu0 0
        %1035 = vmatpush.bf16.msra.mxu0 0
        %1036 = vmatpush.bf16.msra.mxu0 0
        %1037 = vmatpush.bf16.msra.mxu0 0
        %1038 = vmatpush.bf16.msra.mxu0 0
        %1039 = vmatpush.bf16.msra.mxu0 0
        %1040 = vmatpush.bf16.msra.mxu0 %v1031
        %1041 = vmatmul.bf16.gmra.mxu0 %v1028
        %v1042 = vpop.f32.mrf.mxu0
        %v1043 = vadd.f32 0.0, %v1042
        %v1044 = vpop.f32.mrf.mxu0
        %1045 = vdwg.mxu0
        %1047 = vrot.lane.b32.xlu0 %v1043, 16
        %v1048 = vpop.permute.xlu0 %1047
        %vm1050 = vcmask 195712
        %1051 = vst.msk [vmem:[#allocation2] sm:$0xff] %vm1050, %v1048
        %1052 = vrot.lane.b32.xlu0 %v866, 104
        %v1053 = vpop.permute.xlu0 %1052
        %1054 = vrot.lane.b32.xlu0 %v866, 72
        %v1055 = vpop.permute.xlu0 %1054
        %v1057 = vsel %vm870, %v1053, 0
        %v1060 = vsel %vm870, %v1055, 0
        %1062 = vmatpush.bf16.xpose.msra.mxu0 0
        %1063 = vmatpush.bf16.xpose.msra.mxu0 0
        %1064 = vmatpush.bf16.xpose.msra.mxu0 0
        %1065 = vmatpush.bf16.xpose.msra.mxu0 0
        %1066 = vmatpush.bf16.xpose.msra.mxu0 0
        %1067 = vmatpush.bf16.xpose.msra.mxu0 0
        %1068 = vmatpush.bf16.xpose.msra.mxu0 0
        %1069 = vmatpush.bf16.xpose.msra.mxu0 %v1060
        %1070 = vmatmul.bf16.gmra.mxu0 %v1057
        %v1071 = vpop.f32.mrf.mxu0
        %v1072 = vadd.f32 0.0, %v1071
        %v1073 = vpop.f32.mrf.mxu0
        %1074 = vdwg.mxu0
        %v1075 = vmul.f32 %v1072, 0.35355338
        %v1076 = vsel %vm870, %v1075, -inf
        %1077 = vmax.xlane.f32.xlu0 %v1076
        %v1078 = vpop.xlane.xlu0 %1077
        %v1079 = vsub.f32 %v1075, %v1078
        %v1080 = vmul.f32 %v1079, 1.442695
        %v1081 = vpow.pop %v1080
        %v1082 = vsel %vm870, %v1081, 0.0
        %1083 = vadd.xlane.f32.xlu0 %v1082
        %v1084 = vpop.xlane.xlu0 %1083
        %v1085 = vrcp.pop %v1084
        %v1086 = vmul.f32 %v1081, %v1085
        %v1087 = vpack.c.bf16 %v1086, %v1086
        %1088 = vrot.lane.b32.xlu0 %v866, 40
        %v1089 = vpop.permute.xlu0 %1088
        %v1091 = vsel %vm870, %v1087, 0
        %v1094 = vsel %vm908, %v1089, 0
        %1096 = vmatpush.bf16.msra.mxu0 0
        %1097 = vmatpush.bf16.msra.mxu0 0
        %1098 = vmatpush.bf16.msra.mxu0 0
        %1099 = vmatpush.bf16.msra.mxu0 0
        %1100 = vmatpush.bf16.msra.mxu0 0
        %1101 = vmatpush.bf16.msra.mxu0 0
        %1102 = vmatpush.bf16.msra.mxu0 0
        %1103 = vmatpush.bf16.msra.mxu0 %v1094
        %1104 = vmatmul.bf16.gmra.mxu0 %v1091
        %v1105 = vpop.f32.mrf.mxu0
        %v1106 = vadd.f32 0.0, %v1105
        %v1107 = vpop.f32.mrf.mxu0
        %1108 = vdwg.mxu0
        %1110 = vrot.lane.b32.xlu0 %v1106, 24
        %v1111 = vpop.permute.xlu0 %1110
        %vm1113 = vcmask 261312
        %1114 = vst.msk [vmem:[#allocation2] sm:$0xff] %vm1113, %v1111
        %v1115 = vld [vmem:[#allocation2] sm:$0xff]
        %v1116 = vpack.c.bf16 %v1115, %v1115
        %v1117 = vld [vmem:[%s6] sm:$0xf]
        %v1118 = vld [vmem:[%s6 + $0x4] sm:$0xf]
        %v1119 = vld [vmem:[%s6 + $0x8] sm:$0xf]
        %v1120 = vld [vmem:[%s6 + $0xc] sm:$0xf]
        %v1121 = vld [vmem:[%s7] sm:$0x1]
        %v1123 = vperm.slane %v1121, 0
        %v1129 = vunpack.c.l.b16 %v1117
        %v1130 = vunpack.c.l.b16 %v1118
        %v1131 = vunpack.c.l.b16 %v1119
        %v1132 = vunpack.c.l.b16 %v1120
        %v1133 = vpack.c.b16 %v1130, %v1129
        %v1134 = vpack.c.b16 %v1132, %v1131
        %v1138 = vsel %vm789, %v1116, 0
        %1140 = vmatpush.bf16.msra.mxu0 0
        %1141 = vmatpush.bf16.msra.mxu0 0
        %1142 = vmatpush.bf16.msra.mxu0 0
        %1143 = vmatpush.bf16.msra.mxu0 0
        %1144 = vmatpush.bf16.msra.mxu0 0
        %1145 = vmatpush.bf16.msra.mxu0 0
        %1146 = vmatpush.bf16.msra.mxu0 %v1134
        %1147 = vmatpush.bf16.msra.mxu0 %v1133
        %1148 = vmatmul.bf16.gmra.mxu0 %v1138
        %v1149 = vpop.f32.mrf.mxu0
        %v1150 = vadd.f32 %v1123, %v1149
        %v1151 = vpop.f32.mrf.mxu0
        %1152 = vdwg.mxu0
        %v1153 = vadd.f32 %v1150, %v788
        %v1154 = vsel %vm789, %v1153, 0.0
        %1155 = vadd.xlane.f32.xlu0 %v1154
        %v1156 = vpop.xlane.xlu0 %1155
        %v1157 = vmul.f32 %v1156, %v799
        %v1158 = vsub.f32 %v1153, %v1157
        %v1159 = vmul.f32 %v1158, %v1158
        %v1160 = vsel %vm789, %v1159, 0.0
        %1161 = vadd.xlane.f32.xlu0 %v1160
        %v1162 = vpop.xlane.xlu0 %1161
        %v1163 = vmul.f32 %v1162, %v799
        %v1164 = vadd.f32 %v1163, 1e-06
        %v1165 = vrsqrt.pop %v1164
        %v1166 = vmul.f32 %v1165, %v1164
        %v1167 = vmul.f32 %v1166, %v1165
        %v1168 = vmul.f32 0.5, %v1167
        %v1169 = vsub.f32 1.5, %v1168
        %v1170 = vmul.f32 %v1165, %v1169
        %vm1171 = vweird.f32 %v1164
        %vm1172 = vweird.f32 %v1165
        %vm1173 = vmor %vm1171, %vm1172
        %v1174 = vsel %vm1173, %v1165, %v1170
        %v1175 = vmul.f32 %v1158, %v1174
        %v1176 = vld [vmem:[%s8] sm:$0x1]
        %v1178 = vperm.slane %v1176, 0
        %v1180 = vmul.f32 %v1175, %v1178
        %v1181 = vld [vmem:[%s9] sm:$0x1]
        %v1183 = vperm.slane %v1181, 0
        %v1185 = vadd.f32 %v1180, %v1183
        %v1186 = vpack.c.bf16 %v1185, %v1185
        %v1187 = vld [vmem:[%s10] sm:$0xf]
        %v1188 = vld [vmem:[%s10 + $0x4] sm:$0xf]
        %v1189 = vld [vmem:[%s10 + $0x8] sm:$0xf]
        %v1190 = vld [vmem:[%s10 + $0xc] sm:$0xf]
        %v1191 = vld [vmem:[%s11] sm:$0x1]
        %v1193 = vperm.slane %v1191, 0
        %v1199 = vunpack.c.l.b16 %v1187
        %v1200 = vunpack.c.l.b16 %v1188
        %v1201 = vunpack.c.l.b16 %v1189
        %v1202 = vunpack.c.l.b16 %v1190
        %v1203 = vpack.c.b16 %v1200, %v1199
        %v1204 = vpack.c.b16 %v1202, %v1201
        %v1208 = vsel %vm789, %v1186, 0
        %1210 = vmatpush.bf16.msra.mxu0 0
        %1211 = vmatpush.bf16.msra.mxu0 0
        %1212 = vmatpush.bf16.msra.mxu0 0
        %1213 = vmatpush.bf16.msra.mxu0 0
        %1214 = vmatpush.bf16.msra.mxu0 0
        %1215 = vmatpush.bf16.msra.mxu0 0
        %1216 = vmatpush.bf16.msra.mxu0 %v1204
        %1217 = vmatpush.bf16.msra.mxu0 %v1203
        %1218 = vmatmul.bf16.gmra.mxu0 %v1208
        %v1219 = vpop.f32.mrf.mxu0
        %v1220 = vadd.f32 %v1193, %v1219
        %v1221 = vpop.f32.mrf.mxu0
        %1222 = vdwg.mxu0
        %v1223 = vmax.f32 %v1220, 0.0
        %v1224 = vpack.c.bf16 %v1223, %v1223
        %v1225 = vld [vmem:[%s12] sm:$0xf]
        %v1226 = vld [vmem:[%s12 + $0x4] sm:$0xf]
        %v1227 = vld [vmem:[%s12 + $0x8] sm:$0xf]
        %v1228 = vld [vmem:[%s12 + $0xc] sm:$0xf]
        %v1229 = vld [vmem:[%s12 + $0x10] sm:$0xf]
        %v1230 = vld [vmem:[%s12 + $0x14] sm:$0xf]
        %v1231 = vld [vmem:[%s12 + $0x18] sm:$0xf]
        %v1232 = vld [vmem:[%s12 + $0x1c] sm:$0xf]
        %v1233 = vld [vmem:[%s12 + $0x20] sm:$0xf]
        %v1234 = vld [vmem:[%s12 + $0x24] sm:$0xf]
        %v1235 = vld [vmem:[%s12 + $0x28] sm:$0xf]
        %v1236 = vld [vmem:[%s12 + $0x2c] sm:$0xf]
        %v1237 = vld [vmem:[%s12 + $0x30] sm:$0xf]
        %v1238 = vld [vmem:[%s12 + $0x34] sm:$0xf]
        %v1239 = vld [vmem:[%s12 + $0x38] sm:$0xf]
        %v1240 = vld [vmem:[%s12 + $0x3c] sm:$0xf]
        %v1241 = vld [vmem:[%s13] sm:$0x1]
        %v1243 = vperm.slane %v1241, 0
        %v1261 = vunpack.c.l.b16 %v1225
        %v1262 = vunpack.c.l.b16 %v1226
        %v1263 = vunpack.c.l.b16 %v1227
        %v1264 = vunpack.c.l.b16 %v1228
        %v1265 = vunpack.c.l.b16 %v1229
        %v1266 = vunpack.c.l.b16 %v1230
        %v1267 = vunpack.c.l.b16 %v1231
        %v1268 = vunpack.c.l.b16 %v1232
        %v1269 = vunpack.c.l.b16 %v1233
        %v1270 = vunpack.c.l.b16 %v1234
        %v1271 = vunpack.c.l.b16 %v1235
        %v1272 = vunpack.c.l.b16 %v1236
        %v1273 = vunpack.c.l.b16 %v1237
        %v1274 = vunpack.c.l.b16 %v1238
        %v1275 = vunpack.c.l.b16 %v1239
        %v1276 = vunpack.c.l.b16 %v1240
        %v1277 = vpack.c.b16 %v1262, %v1261
        %v1278 = vpack.c.b16 %v1264, %v1263
        %v1279 = vpack.c.b16 %v1266, %v1265
        %v1280 = vpack.c.b16 %v1268, %v1267
        %v1281 = vpack.c.b16 %v1270, %v1269
        %v1282 = vpack.c.b16 %v1272, %v1271
        %v1283 = vpack.c.b16 %v1274, %v1273
        %v1284 = vpack.c.b16 %v1276, %v1275
        %1293 = vmatpush.bf16.msra.mxu0 %v1284
        %1294 = vmatpush.bf16.msra.mxu0 %v1283
        %1295 = vmatpush.bf16.msra.mxu0 %v1282
        %1296 = vmatpush.bf16.msra.mxu0 %v1281
        %1297 = vmatpush.bf16.msra.mxu0 %v1280
        %1298 = vmatpush.bf16.msra.mxu0 %v1279
        %1299 = vmatpush.bf16.msra.mxu0 %v1278
        %1300 = vmatpush.bf16.msra.mxu0 %v1277
        %1301 = vmatmul.bf16.gmra.mxu0 %v1224
        %v1302 = vpop.f32.mrf.mxu0
        %v1303 = vadd.f32 %v1243, %v1302
        %v1304 = vpop.f32.mrf.mxu0
        %1305 = vdwg.mxu0
        %v1306 = vadd.f32 %v1303, %v1153
        %v1307 = vld [vmem:[%s14] sm:$0x1]
        %v1309 = vperm.slane %v1307, 0
        %v1311 = vmul.f32 %v1306, %v1309
        %v1312 = vsel %vm789, %v1311, 0.0
        %1313 = vadd.xlane.f32.xlu0 %v1312
        %v1314 = vpop.xlane.xlu0 %1313
        %v1315 = vld [vmem:[#allocation3] sm:$0x1]
        %v1317 = vperm.slane %v1315, 0
        %v1319 = vadd.f32 %v1314, %v1317
        %v1320 = vxor.u32 %v1319, 2147483648
        %v1321 = vmul.f32 %v1320, 1.442695
        %v1322 = vpow.pop %v1321
        %v1323 = vadd.f32 %v1322, 1.0
        %v1324 = vrcp.pop %v1323
        %v1325 = vmul.f32 %v1323, %v1324
        %v1326 = vsub.f32 1.0, %v1325
        %v1327 = vmul.f32 %v1324, %v1326
        %v1328 = vadd.f32 %v1324, %v1327
        %vm1329 = vweird.f32 %v1323
        %vm1330 = vweird.f32 %v1324
        %vm1331 = vmor %vm1329, %vm1330
        %v1332 = vsel %vm1331, %v1324, %v1328
        %v1333 = vand.u32 2147483647, %v1323
        %vm1334 = vcmp.eq.f32.partialorder %v1333, 8.507059e+37
        %v1335 = vand.u32 %v1323, 2147483648
        %v1336 = vor.u32 1.1754944e-38, %v1335
        %v1337 = vsel %vm1334, %v1336, %v1332
        %v1338 = vmul.f32 1.0, %v1337
        %v1339 = vld [vmem:[%s768] sm:$0xff]
        %v1340 = vsub.f32 1.0, %v1339
        %v1341 = vmin.f32 %v1340, %v1338
        %v1342 = vadd.f32 %v1339, %v1341
        %v1343 = vld [vmem:[%s675] sm:$0xff]
        %v1344 = vsub.f32 1.0, %v1342
        %vm1345 = vcmp.lt.f32.partialorder %v1344, 0.01
        %v1346 = vsel %vm1345, 1, 0
        %v1347 = vcvt.s32.f32 %v1346
        %v1348 = vmax.f32 %v1343, %v1347
        %1349 = vst.msk [vmem:[%s776] sm:$0xff] %vm789, %v1306
        %v1350 = vld [vmem:[%s772] sm:$0xff]
        %1352 = vset.pattern.permute.xlu0 0
        %1353 = vperm.xlu0 %1352, %v1341
        %v1354 = vpop.permute.xlu0 %1353
        %v1356 = vmul.f32 %v1354, %v1306
        %v1357 = vadd.f32 %v1350, %v1356
        %1358 = vst.msk [vmem:[%s780] sm:$0xff] %vm789, %v1357
        %vm1359 = vcmask 7168
        %1360 = vst.msk [vmem:[%s784] sm:$0xff] %vm1359, %v1342
        %1361 = vst.msk [vmem:[%s760] sm:$0xff] %vm1359, %v1348
        %p1362 = scmp.lt.s32.totalorder %s42, 1
        %s1363 = scalar_select %p1362, %s42, 1
        %s1364 = smul.addr %s1363, 8
        %s1365 = scalar_lea.vmem %s19, %s1364
        %p1366 = scmp.lt.s32.totalorder %s42, 1
        %s1367 = scalar_select %p1366, %s42, 1
        %s1368 = smul.addr %s1367, 8
        %s1369 = scalar_lea.vmem %s20, %s1368
        %p1370 = scmp.lt.s32.totalorder %s42, 1
        %s1371 = scalar_select %p1370, %s42, 1
        %s1372 = smul.addr %s1371, 8
        %s1373 = scalar_lea.vmem %s21, %s1372
        %s1374 = sand.u32 %s547, 1
        %s1375 = scalar_lea.sflag [#allocation6], %s1374
        %s1376 = sand.u32 %s547, 1
        %s1377 = smul.addr %s1376, 8
        %s1378 = scalar_lea.vmem [#allocation7], %s1377
        // Predicated region
        $region101: #{body.3} parent=95 // pred_check
          %p1379 = pneg %p479
        $region102: #{body.3} parent=95 // pred_check_branch
          %1381 = sbr.rel (%p1379) target = $region104
        $region103: #{body.3} parent=95 // pred_region
          _
        $region104: #{body.3} parent=95 // pred_fallthru
          _
        // Predicated region
        $region105: #{body.3} parent=95 // pred_check
          %p1382 = pneg %p505
        $region106: #{body.3} parent=95 // pred_check_branch
          %1384 = sbr.rel (%p1382) target = $region108
        $region107: #{body.3} parent=95 // pred_region
          _
        $region108: #{body.3} parent=95 // pred_fallthru
          _
        // Predicated region
        $region109: #{body.3} parent=95 // pred_check
          %p1385 = pneg %p531
        $region110: #{body.3} parent=95 // pred_check_branch
          %1387 = sbr.rel (%p1385) target = $region112
        $region111: #{body.3} parent=95 // pred_region
          _
        $region112: #{body.3} parent=95 // pred_fallthru
          _
        // Predicated region
        $region113: #{body.3} parent=95 // pred_check
          %p1388 = pneg %p557
        $region114: #{body.3} parent=95 // pred_check_branch
          %1390 = sbr.rel (%p1388) target = $region116
        $region115: #{body.3} parent=95 // pred_region
          %1392 = vsyncadd %s1375, 0
          %s1393 = smul.addr %s42, 8
          %s1394 = scalar_lea.hbm %s22, %s1393
          %s1396 = sshll.u32 %s1378, 4
          %s1397 = int_to_ptr.vmem [resolvable:$true] %s1396
          %s1398 = sshll.u32 %s1394, 4
          %s1399 = int_to_ptr.hbm [resolvable:$true] %s1398
          %1401 = dma.vmem_to_hbm [thread:$0]  %s1397, 128, %s1399, %s1375
        $region116: #{body.3} parent=95 // pred_fallthru
          _
      $region96: #{body.3} parent=5 // pred_fallthru
        _
      %p1402 = scmp.le.s32.totalorder 2, %s37
      // Predicated region
      $region117: #{body.3} parent=5 // pred_check
        %p1403 = pneg %p1402
      $region118: #{body.3} parent=5 // pred_check_branch
        %1405 = sbr.rel (%p1403) target = $region120
      $region119: #{body.3} parent=5 // pred_region
        %s1406 = ssub.s32 %s37, 2
        // Predicated region
        $region121: #{body.3} parent=119 // pred_check
          %p1407 = pneg %p485
        $region122: #{body.3} parent=119 // pred_check_branch
          %1409 = sbr.rel (%p1407) target = $region124
        $region123: #{body.3} parent=119 // pred_region
          %p1410 = scmp.lt.s32.totalorder %s43, 1
          %s1411 = scalar_select %p1410, %s43, 1
          %s1412 = smul.addr %s1411, 8
          %s1413 = scalar_lea.vmem %s19, %s1412
        $region124: #{body.3} parent=119 // pred_fallthru
          _
        // Predicated region
        $region125: #{body.3} parent=119 // pred_check
          %p1414 = pneg %p511
        $region126: #{body.3} parent=119 // pred_check_branch
          %1416 = sbr.rel (%p1414) target = $region128
        $region127: #{body.3} parent=119 // pred_region
          %p1417 = scmp.lt.s32.totalorder %s43, 1
          %s1418 = scalar_select %p1417, %s43, 1
          %s1419 = smul.addr %s1418, 8
          %s1420 = scalar_lea.vmem %s20, %s1419
        $region128: #{body.3} parent=119 // pred_fallthru
          _
        // Predicated region
        $region129: #{body.3} parent=119 // pred_check
          %p1421 = pneg %p537
        $region130: #{body.3} parent=119 // pred_check_branch
          %1423 = sbr.rel (%p1421) target = $region132
        $region131: #{body.3} parent=119 // pred_region
          %p1424 = scmp.lt.s32.totalorder %s43, 1
          %s1425 = scalar_select %p1424, %s43, 1
          %s1426 = smul.addr %s1425, 8
          %s1427 = scalar_lea.vmem %s21, %s1426
        $region132: #{body.3} parent=119 // pred_fallthru
          _
        // Predicated region
        $region133: #{body.3} parent=119 // pred_check
          %p1428 = pneg %p563
        $region134: #{body.3} parent=119 // pred_check_branch
          %1430 = sbr.rel (%p1428) target = $region136
        $region135: #{body.3} parent=119 // pred_region
          %s1431 = sand.u32 %s548, 1
          %s1432 = scalar_lea.sflag [#allocation6], %s1431
          %s1433 = sand.u32 %s548, 1
          %s1434 = smul.addr %s1433, 8
          %s1435 = scalar_lea.vmem [#allocation7], %s1434
          %1437 = dma.done %s1432, 128
        $region136: #{body.3} parent=119 // pred_fallthru
          _
      $region120: #{body.3} parent=5 // pred_fallthru
        _
    $region6: #{body.3} parent=1 // loop_footer
      %s41 = sadd.s32 1, %s37
    $region7: #{body.3} parent=1 // loop_footer_branch
      %36 = sbr.rel target = $region3
    $region8: #{body.3} parent=1 // loop_exit
      _
    %1438 = vsyncpa [#allocation5], 1
    %s1439 = scalar_lea.sflag [#allocation5], 1
    %1440 = vsyncpa %s1439, 1
    %1441 = vsyncpa [#allocation6], 1
    %s1442 = scalar_lea.sflag [#allocation6], 1
    %1443 = vsyncpa %s1442, 1

</llo_original>
